<compile_context>
chip_gen: v6e
topology: v6e:2x2x1
jax: 0.10.0
libtpu: 0.0.40
codegen_flags: <defaults>
</compile_context>

<pallas_src>
import functools

import jax
import jax.numpy as jnp
from jax import lax
from jax.experimental import pallas as pl
from jax.experimental.pallas import tpu as pltpu

# ---- module hyper-params (forward requires input_dim == hidden == output_dim) ----
INPUT_DIM = 32
HIDDEN = 32
OUTPUT_DIM = 32
LORDER = 4
DILATION = 1
KH, KW = 3, 8                  # conv kernel_size = (3, 8)
STRIDE_W = 4                   # conv stride = (1, 4); out_channels = stride[1]
CONV_OUT_CH = STRIDE_W
PAD_LEFT_T = DILATION * (LORDER - 1)


# ---------------------------------------------------------------------------
# Fused kernel: conv (+pad +ReLU +torch .view) -> Linear -> causal dconv ->
#               skip -> residual, all in VMEM, one HBM read of x, one write.
# ---------------------------------------------------------------------------
def fsmn_fused_kernel(xr_ref, x_ref, wprev_ref, wcur_ref, bconv_ref,
                      wlb_ref, bl_ref, dw_ref, o_ref, xsh_ref, zpad_ref,
                      *, T, D, H, C, lorder, dilation, bb):
    T4 = T // 4
    pad_t = dilation * (lorder - 1)

    # Zero only the causal-pad rows (they are never overwritten below, so they
    # stay zero for every sample in this grid step).
    xsh_ref[0:1, :] = jnp.zeros((1, 4 * D), jnp.float32)
    zpad_ref[0:pad_t, :] = jnp.zeros((pad_t, H), jnp.float32)

    # Hoist all weight / bias loads out of the per-sample loop.
    w_prev = wprev_ref[...]          # (4D, C*D)
    w_cur = wcur_ref[...]            # (4D, C*D)
    b_conv = bconv_ref[...]          # (1, C*D)
    bl = bl_ref[...]                 # (1, H)
    dw = dw_ref[...]                 # (lorder, H)

    for i in range(bb):              # static loop over batch rows in this block
        # Folded input rows for this sample: xr[s, u*D + d] = x[4s + u, d].
        xsh_ref[1:T4 + 1, :] = xr_ref[i]
        xr_prev = xsh_ref[0:T4, :]        # row s -> x rows 4(s-1)..4(s-1)+3 (zeros at s=0)
        xr_cur = xsh_ref[1:T4 + 1, :]     # row s -> x rows 4s..4s+3

        # Strided Conv2d + padding + bias + ReLU + torch `.view`, folded into
        # two matmuls.  m[s, c*D + j] == lin_in[c*T4 + s, j] (pre-linear).
        m = (jnp.dot(xr_prev, w_prev, preferred_element_type=jnp.float32)
             + jnp.dot(xr_cur, w_cur, preferred_element_type=jnp.float32)
             + b_conv)
        m = jnp.maximum(m, 0.0)           # (T4, C*D)

        # Linear, one channel-block of view-rows at a time, written straight
        # into the causally padded scratch (rows [pad_t:] hold z in row order).
        for c in range(C):
            z_c = jnp.dot(m, wlb_ref[c], preferred_element_type=jnp.float32) + bl
            zpad_ref[pad_t + c * T4: pad_t + (c + 1) * T4, :] = z_c

        z = zpad_ref[pad_t:pad_t + T, :]  # (T, H)

        # Causal depthwise conv over the "time" (view-row) axis + skip connect.
        acc = z
        for l in range(lorder):
            acc = acc + dw[l:l + 1, :] * zpad_ref[dilation * l: dilation * l + T, :]

        # Outer residual against the original input.
        o_ref[i] = x_ref[i] + acc


# ---------------------------------------------------------------------------
# Wrapper-side weight folding (tiny, one-time glue)
# ---------------------------------------------------------------------------
def _build_fused_conv_weights(wc, bc, D):
    """Fold ConstantPad2d + strided Conv2d + the torch `.view` permutation into
    two (4D, C*D) matrices acting on the 4-row-folded input xr (T/4, 4D)."""
    C = STRIDE_W
    F = D // STRIDE_W

    # A[kh, d, c, fi] = wc[c, 0, kh, kw] with kw = d + 4 - 4*fi (0 if out of range);
    # the width-left zero pad is absorbed here.
    d_idx = jnp.arange(D)
    fi_idx = jnp.arange(F)
    kw = d_idx[:, None] + STRIDE_W - STRIDE_W * fi_idx[None, :]       # (D, F)
    kw_ok = (kw >= 0) & (kw < KW)
    kw_safe = jnp.clip(kw, 0, KW - 1)
    wc3 = wc[:, 0, :, :]                                              # (C, KH, KW)
    a_ckdf = wc3[:, :, kw_safe] * kw_ok[None, None, :, :]             # (C, KH, D, F)
    a_kdcf = jnp.transpose(a_ckdf, (1, 2, 0, 3))                      # (KH, D, C, F)

    u_idx = jnp.arange(4)      # chunk index inside one folded row (x row 4s+u)
    a_idx = jnp.arange(4)      # view sub-row index (output column group)

    def build(kh_mat):
        ok = (kh_mat >= 0) & (kh_mat < KH)
        kh_safe = jnp.clip(kh_mat, 0, KH - 1)
        w = a_kdcf[kh_safe] * ok[:, :, None, None, None]              # (u, a, D, C, F)
        w = jnp.transpose(w, (0, 2, 3, 1, 4))                         # (u, D, C, a, F)
        return w.reshape(4 * D, C * D).astype(jnp.float32)

    # current fold-row contribution: kh = u + (KH-1) - a
    w_cur = build(u_idx[:, None] + (KH - 1) - a_idx[None, :])
    # previous fold-row contribution (causal time pad): kh = u + (KH-1) - 4 - a
    w_prev = build(u_idx[:, None] + (KH - 1) - 4 - a_idx[None, :])
    b_conv = jnp.repeat(bc, D).reshape(1, C * D).astype(jnp.float32)
    return w_prev, w_cur, b_conv


def _build_linear_blocks(wl, D):
    """wl_blocks[c, c'*D + j, h] = [c == c'] * wl[h, j]  (per-channel Linear)."""
    C = STRIDE_W
    wlT = wl.T.astype(jnp.float32)                                    # (D, H)
    eye_c = jnp.eye(C, dtype=jnp.float32)
    return (eye_c[:, :, None, None] * wlT[None, None, :, :]).reshape(
        C, C * D, wl.shape[0])


# ---------------------------------------------------------------------------
# Forward wrapper
# ---------------------------------------------------------------------------
def cnn_fsmn_forward(x, params, *, block_b=None):
    wc = params["conv_w"]     # (4, 1, 3, 8)
    bc = params["conv_b"]     # (4,)
    wl = params["lin_w"]      # (H, D)
    bl = params["lin_b"]      # (H,)
    dw = params["dconv_w"]    # (H, 1, lorder, 1)

    B, T, D = x.shape
    H = wl.shape[0]
    C = STRIDE_W
    assert D % STRIDE_W == 0, "feature dim must be a multiple of the conv stride (4)"
    assert T % 4 == 0, "time dim must be a multiple of 4 (torch .view row grouping)"
    assert H == D == dw.shape[0], "forward requires input_dim == hidden == output_dim"

    w_prev, w_cur, b_conv = _build_fused_conv_weights(wc, bc, D)
    wl_blocks = _build_linear_blocks(wl, D)
    bl2 = bl.reshape(1, H).astype(jnp.float32)
    dw2 = dw.reshape(H, LORDER).T.astype(jnp.float32)                 # (lorder, H)

    # Free row-major refold: xr[b, s, u*D + d] = x[b, 4s + u, d].
    xr = x.reshape(B, T // 4, 4 * D)

    # Fatten grid steps (amortize ~0.35us/step) while keeping multiple steps
    # when B is large so the "parallel" axis can shard across v7x's 2 TCs.
    if block_b is None:
        block_b = 1
        while block_b < B and B % (2 * block_b) == 0 and 2 * block_b * T <= 512:
            block_b *= 2
    assert B % block_b == 0
    grid = (B // block_b,)

    kernel = functools.partial(
        fsmn_fused_kernel, T=T, D=D, H=H, C=C,
        lorder=LORDER, dilation=DILATION, bb=block_b)

    return pl.pallas_call(
        kernel,
        out_shape=jax.ShapeDtypeStruct((B, T, H), jnp.float32),
        grid=grid,
        in_specs=[
            pl.BlockSpec((block_b, T // 4, 4 * D), lambda i: (i, 0, 0)),  # xr
            pl.BlockSpec((block_b, T, D), lambda i: (i, 0, 0)),           # x (residual)
            pl.BlockSpec((4 * D, C * D), lambda i: (0, 0)),               # w_prev
            pl.BlockSpec((4 * D, C * D), lambda i: (0, 0)),               # w_cur
            pl.BlockSpec((1, C * D), lambda i: (0, 0)),                   # conv bias
            pl.BlockSpec((C, C * D, H), lambda i: (0, 0, 0)),             # linear blocks
            pl.BlockSpec((1, H), lambda i: (0, 0)),                       # linear bias
            pl.BlockSpec((LORDER, H), lambda i: (0, 0)),                  # dconv taps
        ],
        out_specs=pl.BlockSpec((block_b, T, H), lambda i: (i, 0, 0)),
        scratch_shapes=[
            pltpu.VMEM((T // 4 + 1, 4 * D), jnp.float32),                 # shifted xr
            pltpu.VMEM((T + PAD_LEFT_T, H), jnp.float32),                 # causal z pad
        ],
        compiler_params=pltpu.CompilerParams(
            dimension_semantics=("parallel",)),
    )(xr, x, w_prev, w_cur, b_conv, wl_blocks, bl2, dw2)


# ---------------------------------------------------------------------------
# Pure-JAX reference mirroring the PyTorch ops (for self-check)
# ---------------------------------------------------------------------------
def reference_forward(x, params):
    wc, bc = params["conv_w"], params["conv_b"]
    wl, bl = params["lin_w"], params["lin_b"]
    dw = params["dconv_w"]
    B, T, D = x.shape
    H = wl.shape[0]

    xp = jnp.pad(x[:, None, :, :], ((0, 0), (0, 0), (KH - 1, 0), (STRIDE_W, 0)))
    conv = lax.conv_general_dilated(
        xp, wc, window_strides=(1, STRIDE_W), padding="VALID",
        dimension_numbers=("NCHW", "OIHW", "NCHW"),
        precision=lax.Precision.HIGHEST)
    conv = conv + bc.reshape(1, -1, 1, 1)
    conv = jnp.maximum(conv, 0.0)                      # (B, 4, T, D//4)
    v = conv.reshape(B, T, D)                          # torch .view on contiguous NCHW
    z = jnp.einsum("btd,hd->bth", v, wl,
                   precision=lax.Precision.HIGHEST) + bl
    zc = jnp.transpose(z[:, None, :, :], (0, 3, 2, 1))  # (B, H, T, 1)
    y = jnp.pad(zc, ((0, 0), (0, 0), (PAD_LEFT_T, 0), (0, 0)))
    dout = lax.conv_general_dilated(
        y, dw, window_strides=(1, 1), padding="VALID",
        rhs_dilation=(DILATION, 1),
        dimension_numbers=("NCHW", "OIHW", "NCHW"),
        feature_group_count=H, precision=lax.Precision.HIGHEST)
    out = dout + zc                                    # skip_connect
    out = jnp.transpose(out, (0, 3, 2, 1)).reshape(B, T, H)
    return x + out


if __name__ == "__main__":
    key = jax.random.PRNGKey(0)
    B, T, D = 2, 8, INPUT_DIM
    k1, k2, k3, k4, k5, k6 = jax.random.split(key, 6)
    params = {
        "conv_w": 0.2 * jax.random.normal(k1, (CONV_OUT_CH, 1, KH, KW), jnp.float32),
        "conv_b": 0.1 * jax.random.normal(k2, (CONV_OUT_CH,), jnp.float32),
        "lin_w": (1.0 / jnp.sqrt(D)) * jax.random.normal(k3, (HIDDEN, D), jnp.float32),
        "lin_b": 0.1 * jax.random.normal(k4, (HIDDEN,), jnp.float32),
        "dconv_w": 0.2 * jax.random.normal(k5, (OUTPUT_DIM, 1, LORDER, 1), jnp.float32),
    }
    x = jax.random.normal(k6, (B, T, D), jnp.float32)

    out = jax.block_until_ready(cnn_fsmn_forward(x, params))
    ref = reference_forward(x, params)

    assert out.shape == (B, T, OUTPUT_DIM)
    max_err = float(jnp.max(jnp.abs(out - ref)))
    if max_err < 1e-2:
        print("KERNEL_OK")
    else:
        print("MAX_ERR", max_err)
</pallas_src>

<mosaic_0001>
module attributes {stable_mosaic.version = 11 : i64} {
  func.func @fsmn_fused_kernel(%arg0: i32, %arg1: memref<2x2x128xf32, #tpu.memory_space<vmem>>, %arg2: memref<2x8x32xf32, #tpu.memory_space<vmem>>, %arg3: memref<128x128xf32, #tpu.memory_space<vmem>>, %arg4: memref<128x128xf32, #tpu.memory_space<vmem>>, %arg5: memref<1x128xf32, #tpu.memory_space<vmem>>, %arg6: memref<4x128x32xf32, #tpu.memory_space<vmem>>, %arg7: memref<1x32xf32, #tpu.memory_space<vmem>>, %arg8: memref<4x32xf32, #tpu.memory_space<vmem>>, %arg9: memref<2x8x32xf32, #tpu.memory_space<vmem>>, %arg10: memref<3x128xf32, #tpu.memory_space<vmem>>, %arg11: memref<11x32xf32, #tpu.memory_space<vmem>>) attributes {dimension_semantics = [#tpu.dimension_semantics<parallel>], iteration_bounds = array<i64: 1>, scalar_prefetch = 0 : i64, scratch_operands = 2 : i64, tpu.core_type = #tpu.core_type<tc>, window_params = [{transform_indices = @transform_0, window_bounds = array<i64: 2, 2, 128>}, {transform_indices = @transform_1, window_bounds = array<i64: 2, 8, 32>}, {pipeline_mode = #tpu.pipeline_mode<synchronous>, transform_indices = @transform_2, window_bounds = array<i64: 128, 128>}, {pipeline_mode = #tpu.pipeline_mode<synchronous>, transform_indices = @transform_3, window_bounds = array<i64: 128, 128>}, {pipeline_mode = #tpu.pipeline_mode<synchronous>, transform_indices = @transform_4, window_bounds = array<i64: 1, 128>}, {pipeline_mode = #tpu.pipeline_mode<synchronous>, transform_indices = @transform_5, window_bounds = array<i64: 4, 128, 32>}, {pipeline_mode = #tpu.pipeline_mode<synchronous>, transform_indices = @transform_6, window_bounds = array<i64: 1, 32>}, {pipeline_mode = #tpu.pipeline_mode<synchronous>, transform_indices = @transform_7, window_bounds = array<i64: 4, 32>}, {transform_indices = @transform_8, window_bounds = array<i64: 2, 8, 32>}]} {
    %cst = arith.constant 0.000000e+00 : f32
    %0 = vector.broadcast %cst : f32 to vector<1x128xf32>
    %c0 = arith.constant 0 : index
    %c0_0 = arith.constant 0 : index
    %1 = vector.load %arg10[%c0, %c0_0] : memref<3x128xf32, #tpu.memory_space<vmem>>, vector<1x128xf32>
    tpu.vector_store %arg10[%c0, %c0_0], %0 {strides = array<i32>} : memref<3x128xf32, #tpu.memory_space<vmem>>, vector<1x128xf32>,
    %cst_1 = arith.constant 0.000000e+00 : f32
    %2 = vector.broadcast %cst_1 : f32 to vector<3x32xf32>
    %c0_2 = arith.constant 0 : index
    %c0_3 = arith.constant 0 : index
    %3 = vector.load %arg11[%c0_2, %c0_3] : memref<11x32xf32, #tpu.memory_space<vmem>>, vector<3x32xf32>
    tpu.vector_store %arg11[%c0_2, %c0_3], %2 {strides = array<i32>} : memref<11x32xf32, #tpu.memory_space<vmem>>, vector<3x32xf32>,
    %c0_4 = arith.constant 0 : index
    %c0_5 = arith.constant 0 : index
    %4 = vector.load %arg3[%c0_4, %c0_5] : memref<128x128xf32, #tpu.memory_space<vmem>>, vector<128x128xf32>
    %c0_6 = arith.constant 0 : index
    %c0_7 = arith.constant 0 : index
    %5 = vector.load %arg4[%c0_6, %c0_7] : memref<128x128xf32, #tpu.memory_space<vmem>>, vector<128x128xf32>
    %c0_8 = arith.constant 0 : index
    %c0_9 = arith.constant 0 : index
    %6 = vector.load %arg5[%c0_8, %c0_9] : memref<1x128xf32, #tpu.memory_space<vmem>>, vector<1x128xf32>
    %c0_10 = arith.constant 0 : index
    %c0_11 = arith.constant 0 : index
    %7 = vector.load %arg7[%c0_10, %c0_11] : memref<1x32xf32, #tpu.memory_space<vmem>>, vector<1x32xf32>
    %c0_12 = arith.constant 0 : index
    %c0_13 = arith.constant 0 : index
    %8 = vector.load %arg8[%c0_12, %c0_13] : memref<4x32xf32, #tpu.memory_space<vmem>>, vector<4x32xf32>
    %c0_14 = arith.constant 0 : index
    %c0_15 = arith.constant 0 : index
    %c0_16 = arith.constant 0 : index
    %9 = vector.load %arg1[%c0_14, %c0_15, %c0_16] : memref<2x2x128xf32, #tpu.memory_space<vmem>>, vector<1x2x128xf32>
    %10 = vector.shape_cast %9 : vector<1x2x128xf32> to vector<2x128xf32>
    %c1 = arith.constant 1 : index
    %c0_17 = arith.constant 0 : index
    %11 = vector.load %arg10[%c1, %c0_17] : memref<3x128xf32, #tpu.memory_space<vmem>>, vector<2x128xf32>
    tpu.vector_store %arg10[%c1, %c0_17], %10 {strides = array<i32>} : memref<3x128xf32, #tpu.memory_space<vmem>>, vector<2x128xf32>,
    %c0_18 = arith.constant 0 : index
    %c0_19 = arith.constant 0 : index
    %12 = vector.load %arg10[%c0_18, %c0_19] : memref<3x128xf32, #tpu.memory_space<vmem>>, vector<2x128xf32>
    %c1_20 = arith.constant 1 : index
    %c0_21 = arith.constant 0 : index
    %13 = vector.load %arg10[%c1_20, %c0_21] : memref<3x128xf32, #tpu.memory_space<vmem>>, vector<2x128xf32>
    %cst_22 = arith.constant dense<0.000000e+00> : vector<2x128xf32>
    %14 = tpu.matmul %12, %4, %cst_22 {dimension_numbers = #tpu.dot_dimension_numbers<[1], [0], [0], [1], [0, 0, 1, 1], [], []>} : vector<2x128xf32>, vector<128x128xf32>, vector<2x128xf32> -> vector<2x128xf32>
    %cst_23 = arith.constant dense<0.000000e+00> : vector<2x128xf32>
    %15 = tpu.matmul %13, %5, %cst_23 {dimension_numbers = #tpu.dot_dimension_numbers<[1], [0], [0], [1], [0, 0, 1, 1], [], []>} : vector<2x128xf32>, vector<128x128xf32>, vector<2x128xf32> -> vector<2x128xf32>
    %16 = arith.addf %14, %15 : vector<2x128xf32>
    %17 = vector.broadcast %6 : vector<1x128xf32> to vector<2x128xf32>
    %18 = arith.addf %16, %17 : vector<2x128xf32>
    %cst_24 = arith.constant 0.000000e+00 : f32
    %19 = vector.broadcast %cst_24 : f32 to vector<2x128xf32>
    %20 = arith.maximumf %18, %19 : vector<2x128xf32>
    %c0_25 = arith.constant 0 : index
    %c0_26 = arith.constant 0 : index
    %c0_27 = arith.constant 0 : index
    %21 = vector.load %arg6[%c0_25, %c0_26, %c0_27] : memref<4x128x32xf32, #tpu.memory_space<vmem>>, vector<1x128x32xf32>
    %22 = vector.shape_cast %21 : vector<1x128x32xf32> to vector<128x32xf32>
    %cst_28 = arith.constant dense<0.000000e+00> : vector<2x32xf32>
    %23 = tpu.matmul %20, %22, %cst_28 {dimension_numbers = #tpu.dot_dimension_numbers<[1], [0], [0], [1], [0, 0, 1, 1], [], []>} : vector<2x128xf32>, vector<128x32xf32>, vector<2x32xf32> -> vector<2x32xf32>
    %24 = vector.broadcast %7 : vector<1x32xf32> to vector<2x32xf32>
    %25 = arith.addf %23, %24 : vector<2x32xf32>
    %c3 = arith.constant 3 : index
    %c0_29 = arith.constant 0 : index
    %26 = vector.load %arg11[%c3, %c0_29] : memref<11x32xf32, #tpu.memory_space<vmem>>, vector<2x32xf32>
    tpu.vector_store %arg11[%c3, %c0_29], %25 {strides = array<i32>} : memref<11x32xf32, #tpu.memory_space<vmem>>, vector<2x32xf32>,
    %c1_30 = arith.constant 1 : index
    %c0_31 = arith.constant 0 : index
    %c0_32 = arith.constant 0 : index
    %27 = vector.load %arg6[%c1_30, %c0_31, %c0_32] : memref<4x128x32xf32, #tpu.memory_space<vmem>>, vector<1x128x32xf32>
    %28 = vector.shape_cast %27 : vector<1x128x32xf32> to vector<128x32xf32>
    %cst_33 = arith.constant dense<0.000000e+00> : vector<2x32xf32>
    %29 = tpu.matmul %20, %28, %cst_33 {dimension_numbers = #tpu.dot_dimension_numbers<[1], [0], [0], [1], [0, 0, 1, 1], [], []>} : vector<2x128xf32>, vector<128x32xf32>, vector<2x32xf32> -> vector<2x32xf32>
    %30 = vector.broadcast %7 : vector<1x32xf32> to vector<2x32xf32>
    %31 = arith.addf %29, %30 : vector<2x32xf32>
    %c5 = arith.constant 5 : index
    %c0_34 = arith.constant 0 : index
    %32 = vector.load %arg11[%c5, %c0_34] : memref<11x32xf32, #tpu.memory_space<vmem>>, vector<2x32xf32>
    tpu.vector_store %arg11[%c5, %c0_34], %31 {strides = array<i32>} : memref<11x32xf32, #tpu.memory_space<vmem>>, vector<2x32xf32>,
    %c2 = arith.constant 2 : index
    %c0_35 = arith.constant 0 : index
    %c0_36 = arith.constant 0 : index
    %33 = vector.load %arg6[%c2, %c0_35, %c0_36] : memref<4x128x32xf32, #tpu.memory_space<vmem>>, vector<1x128x32xf32>
    %34 = vector.shape_cast %33 : vector<1x128x32xf32> to vector<128x32xf32>
    %cst_37 = arith.constant dense<0.000000e+00> : vector<2x32xf32>
    %35 = tpu.matmul %20, %34, %cst_37 {dimension_numbers = #tpu.dot_dimension_numbers<[1], [0], [0], [1], [0, 0, 1, 1], [], []>} : vector<2x128xf32>, vector<128x32xf32>, vector<2x32xf32> -> vector<2x32xf32>
    %36 = vector.broadcast %7 : vector<1x32xf32> to vector<2x32xf32>
    %37 = arith.addf %35, %36 : vector<2x32xf32>
    %c7 = arith.constant 7 : index
    %c0_38 = arith.constant 0 : index
    %38 = vector.load %arg11[%c7, %c0_38] : memref<11x32xf32, #tpu.memory_space<vmem>>, vector<2x32xf32>
    tpu.vector_store %arg11[%c7, %c0_38], %37 {strides = array<i32>} : memref<11x32xf32, #tpu.memory_space<vmem>>, vector<2x32xf32>,
    %c3_39 = arith.constant 3 : index
    %c0_40 = arith.constant 0 : index
    %c0_41 = arith.constant 0 : index
    %39 = vector.load %arg6[%c3_39, %c0_40, %c0_41] : memref<4x128x32xf32, #tpu.memory_space<vmem>>, vector<1x128x32xf32>
    %40 = vector.shape_cast %39 : vector<1x128x32xf32> to vector<128x32xf32>
    %cst_42 = arith.constant dense<0.000000e+00> : vector<2x32xf32>
    %41 = tpu.matmul %20, %40, %cst_42 {dimension_numbers = #tpu.dot_dimension_numbers<[1], [0], [0], [1], [0, 0, 1, 1], [], []>} : vector<2x128xf32>, vector<128x32xf32>, vector<2x32xf32> -> vector<2x32xf32>
    %42 = vector.broadcast %7 : vector<1x32xf32> to vector<2x32xf32>
    %43 = arith.addf %41, %42 : vector<2x32xf32>
    %c9 = arith.constant 9 : index
    %c0_43 = arith.constant 0 : index
    %44 = vector.load %arg11[%c9, %c0_43] : memref<11x32xf32, #tpu.memory_space<vmem>>, vector<2x32xf32>
    tpu.vector_store %arg11[%c9, %c0_43], %43 {strides = array<i32>} : memref<11x32xf32, #tpu.memory_space<vmem>>, vector<2x32xf32>,
    %c3_44 = arith.constant 3 : index
    %c0_45 = arith.constant 0 : index
    %45 = vector.load %arg11[%c3_44, %c0_45] : memref<11x32xf32, #tpu.memory_space<vmem>>, vector<8x32xf32>
    %46 = vector.extract_strided_slice %8 {offsets = [0, 0], sizes = [1, 32], strides = [1, 1]} : vector<4x32xf32> to vector<1x32xf32>
    %c0_46 = arith.constant 0 : index
    %c0_47 = arith.constant 0 : index
    %47 = vector.load %arg11[%c0_46, %c0_47] : memref<11x32xf32, #tpu.memory_space<vmem>>, vector<8x32xf32>
    %48 = vector.broadcast %46 : vector<1x32xf32> to vector<8x32xf32>
    %49 = arith.mulf %48, %47 : vector<8x32xf32>
    %50 = arith.addf %45, %49 : vector<8x32xf32>
    %51 = vector.extract_strided_slice %8 {offsets = [1, 0], sizes = [1, 32], strides = [1, 1]} : vector<4x32xf32> to vector<1x32xf32>
    %c1_48 = arith.constant 1 : index
    %c0_49 = arith.constant 0 : index
    %52 = vector.load %arg11[%c1_48, %c0_49] : memref<11x32xf32, #tpu.memory_space<vmem>>, vector<8x32xf32>
    %53 = vector.broadcast %51 : vector<1x32xf32> to vector<8x32xf32>
    %54 = arith.mulf %53, %52 : vector<8x32xf32>
    %55 = arith.addf %50, %54 : vector<8x32xf32>
    %56 = vector.extract_strided_slice %8 {offsets = [2, 0], sizes = [1, 32], strides = [1, 1]} : vector<4x32xf32> to vector<1x32xf32>
    %c2_50 = arith.constant 2 : index
    %c0_51 = arith.constant 0 : index
    %57 = vector.load %arg11[%c2_50, %c0_51] : memref<11x32xf32, #tpu.memory_space<vmem>>, vector<8x32xf32>
    %58 = vector.broadcast %56 : vector<1x32xf32> to vector<8x32xf32>
    %59 = arith.mulf %58, %57 : vector<8x32xf32>
    %60 = arith.addf %55, %59 : vector<8x32xf32>
    %61 = vector.extract_strided_slice %8 {offsets = [3, 0], sizes = [1, 32], strides = [1, 1]} : vector<4x32xf32> to vector<1x32xf32>
    %c3_52 = arith.constant 3 : index
    %c0_53 = arith.constant 0 : index
    %62 = vector.load %arg11[%c3_52, %c0_53] : memref<11x32xf32, #tpu.memory_space<vmem>>, vector<8x32xf32>
    %63 = vector.broadcast %61 : vector<1x32xf32> to vector<8x32xf32>
    %64 = arith.mulf %63, %62 : vector<8x32xf32>
    %65 = arith.addf %60, %64 : vector<8x32xf32>
    %c0_54 = arith.constant 0 : index
    %c0_55 = arith.constant 0 : index
    %c0_56 = arith.constant 0 : index
    %66 = vector.load %arg2[%c0_54, %c0_55, %c0_56] : memref<2x8x32xf32, #tpu.memory_space<vmem>>, vector<1x8x32xf32>
    %67 = vector.shape_cast %66 : vector<1x8x32xf32> to vector<8x32xf32>
    %68 = arith.addf %67, %65 : vector<8x32xf32>
    %c0_57 = arith.constant 0 : index
    %c0_58 = arith.constant 0 : index
    %c0_59 = arith.constant 0 : index
    %69 = vector.load %arg9[%c0_57, %c0_58, %c0_59] : memref<2x8x32xf32, #tpu.memory_space<vmem>>, vector<1x8x32xf32>
    %70 = vector.shape_cast %69 : vector<1x8x32xf32> to vector<8x32xf32>
    %71 = vector.shape_cast %68 : vector<8x32xf32> to vector<1x8x32xf32>
    tpu.vector_store %arg9[%c0_57, %c0_58, %c0_59], %71 {strides = array<i32>} : memref<2x8x32xf32, #tpu.memory_space<vmem>>, vector<1x8x32xf32>,
    %c1_60 = arith.constant 1 : index
    %c0_61 = arith.constant 0 : index
    %c0_62 = arith.constant 0 : index
    %72 = vector.load %arg1[%c1_60, %c0_61, %c0_62] : memref<2x2x128xf32, #tpu.memory_space<vmem>>, vector<1x2x128xf32>
    %73 = vector.shape_cast %72 : vector<1x2x128xf32> to vector<2x128xf32>
    %c1_63 = arith.constant 1 : index
    %c0_64 = arith.constant 0 : index
    %74 = vector.load %arg10[%c1_63, %c0_64] : memref<3x128xf32, #tpu.memory_space<vmem>>, vector<2x128xf32>
    tpu.vector_store %arg10[%c1_63, %c0_64], %73 {strides = array<i32>} : memref<3x128xf32, #tpu.memory_space<vmem>>, vector<2x128xf32>,
    %c0_65 = arith.constant 0 : index
    %c0_66 = arith.constant 0 : index
    %75 = vector.load %arg10[%c0_65, %c0_66] : memref<3x128xf32, #tpu.memory_space<vmem>>, vector<2x128xf32>
    %c1_67 = arith.constant 1 : index
    %c0_68 = arith.constant 0 : index
    %76 = vector.load %arg10[%c1_67, %c0_68] : memref<3x128xf32, #tpu.memory_space<vmem>>, vector<2x128xf32>
    %cst_69 = arith.constant dense<0.000000e+00> : vector<2x128xf32>
    %77 = tpu.matmul %75, %4, %cst_69 {dimension_numbers = #tpu.dot_dimension_numbers<[1], [0], [0], [1], [0, 0, 1, 1], [], []>} : vector<2x128xf32>, vector<128x128xf32>, vector<2x128xf32> -> vector<2x128xf32>
    %cst_70 = arith.constant dense<0.000000e+00> : vector<2x128xf32>
    %78 = tpu.matmul %76, %5, %cst_70 {dimension_numbers = #tpu.dot_dimension_numbers<[1], [0], [0], [1], [0, 0, 1, 1], [], []>} : vector<2x128xf32>, vector<128x128xf32>, vector<2x128xf32> -> vector<2x128xf32>
    %79 = arith.addf %77, %78 : vector<2x128xf32>
    %80 = vector.broadcast %6 : vector<1x128xf32> to vector<2x128xf32>
    %81 = arith.addf %79, %80 : vector<2x128xf32>
    %cst_71 = arith.constant 0.000000e+00 : f32
    %82 = vector.broadcast %cst_71 : f32 to vector<2x128xf32>
    %83 = arith.maximumf %81, %82 : vector<2x128xf32>
    %c0_72 = arith.constant 0 : index
    %c0_73 = arith.constant 0 : index
    %c0_74 = arith.constant 0 : index
    %84 = vector.load %arg6[%c0_72, %c0_73, %c0_74] : memref<4x128x32xf32, #tpu.memory_space<vmem>>, vector<1x128x32xf32>
    %85 = vector.shape_cast %84 : vector<1x128x32xf32> to vector<128x32xf32>
    %cst_75 = arith.constant dense<0.000000e+00> : vector<2x32xf32>
    %86 = tpu.matmul %83, %85, %cst_75 {dimension_numbers = #tpu.dot_dimension_numbers<[1], [0], [0], [1], [0, 0, 1, 1], [], []>} : vector<2x128xf32>, vector<128x32xf32>, vector<2x32xf32> -> vector<2x32xf32>
    %87 = vector.broadcast %7 : vector<1x32xf32> to vector<2x32xf32>
    %88 = arith.addf %86, %87 : vector<2x32xf32>
    %c3_76 = arith.constant 3 : index
    %c0_77 = arith.constant 0 : index
    %89 = vector.load %arg11[%c3_76, %c0_77] : memref<11x32xf32, #tpu.memory_space<vmem>>, vector<2x32xf32>
    tpu.vector_store %arg11[%c3_76, %c0_77], %88 {strides = array<i32>} : memref<11x32xf32, #tpu.memory_space<vmem>>, vector<2x32xf32>,
    %c1_78 = arith.constant 1 : index
    %c0_79 = arith.constant 0 : index
    %c0_80 = arith.constant 0 : index
    %90 = vector.load %arg6[%c1_78, %c0_79, %c0_80] : memref<4x128x32xf32, #tpu.memory_space<vmem>>, vector<1x128x32xf32>
    %91 = vector.shape_cast %90 : vector<1x128x32xf32> to vector<128x32xf32>
    %cst_81 = arith.constant dense<0.000000e+00> : vector<2x32xf32>
    %92 = tpu.matmul %83, %91, %cst_81 {dimension_numbers = #tpu.dot_dimension_numbers<[1], [0], [0], [1], [0, 0, 1, 1], [], []>} : vector<2x128xf32>, vector<128x32xf32>, vector<2x32xf32> -> vector<2x32xf32>
    %93 = vector.broadcast %7 : vector<1x32xf32> to vector<2x32xf32>
    %94 = arith.addf %92, %93 : vector<2x32xf32>
    %c5_82 = arith.constant 5 : index
    %c0_83 = arith.constant 0 : index
    %95 = vector.load %arg11[%c5_82, %c0_83] : memref<11x32xf32, #tpu.memory_space<vmem>>, vector<2x32xf32>
    tpu.vector_store %arg11[%c5_82, %c0_83], %94 {strides = array<i32>} : memref<11x32xf32, #tpu.memory_space<vmem>>, vector<2x32xf32>,
    %c2_84 = arith.constant 2 : index
    %c0_85 = arith.constant 0 : index
    %c0_86 = arith.constant 0 : index
    %96 = vector.load %arg6[%c2_84, %c0_85, %c0_86] : memref<4x128x32xf32, #tpu.memory_space<vmem>>, vector<1x128x32xf32>
    %97 = vector.shape_cast %96 : vector<1x128x32xf32> to vector<128x32xf32>
    %cst_87 = arith.constant dense<0.000000e+00> : vector<2x32xf32>
    %98 = tpu.matmul %83, %97, %cst_87 {dimension_numbers = #tpu.dot_dimension_numbers<[1], [0], [0], [1], [0, 0, 1, 1], [], []>} : vector<2x128xf32>, vector<128x32xf32>, vector<2x32xf32> -> vector<2x32xf32>
    %99 = vector.broadcast %7 : vector<1x32xf32> to vector<2x32xf32>
    %100 = arith.addf %98, %99 : vector<2x32xf32>
    %c7_88 = arith.constant 7 : index
    %c0_89 = arith.constant 0 : index
    %101 = vector.load %arg11[%c7_88, %c0_89] : memref<11x32xf32, #tpu.memory_space<vmem>>, vector<2x32xf32>
    tpu.vector_store %arg11[%c7_88, %c0_89], %100 {strides = array<i32>} : memref<11x32xf32, #tpu.memory_space<vmem>>, vector<2x32xf32>,
    %c3_90 = arith.constant 3 : index
    %c0_91 = arith.constant 0 : index
    %c0_92 = arith.constant 0 : index
    %102 = vector.load %arg6[%c3_90, %c0_91, %c0_92] : memref<4x128x32xf32, #tpu.memory_space<vmem>>, vector<1x128x32xf32>
    %103 = vector.shape_cast %102 : vector<1x128x32xf32> to vector<128x32xf32>
    %cst_93 = arith.constant dense<0.000000e+00> : vector<2x32xf32>
    %104 = tpu.matmul %83, %103, %cst_93 {dimension_numbers = #tpu.dot_dimension_numbers<[1], [0], [0], [1], [0, 0, 1, 1], [], []>} : vector<2x128xf32>, vector<128x32xf32>, vector<2x32xf32> -> vector<2x32xf32>
    %105 = vector.broadcast %7 : vector<1x32xf32> to vector<2x32xf32>
    %106 = arith.addf %104, %105 : vector<2x32xf32>
    %c9_94 = arith.constant 9 : index
    %c0_95 = arith.constant 0 : index
    %107 = vector.load %arg11[%c9_94, %c0_95] : memref<11x32xf32, #tpu.memory_space<vmem>>, vector<2x32xf32>
    tpu.vector_store %arg11[%c9_94, %c0_95], %106 {strides = array<i32>} : memref<11x32xf32, #tpu.memory_space<vmem>>, vector<2x32xf32>,
    %c3_96 = arith.constant 3 : index
    %c0_97 = arith.constant 0 : index
    %108 = vector.load %arg11[%c3_96, %c0_97] : memref<11x32xf32, #tpu.memory_space<vmem>>, vector<8x32xf32>
    %109 = vector.extract_strided_slice %8 {offsets = [0, 0], sizes = [1, 32], strides = [1, 1]} : vector<4x32xf32> to vector<1x32xf32>
    %c0_98 = arith.constant 0 : index
    %c0_99 = arith.constant 0 : index
    %110 = vector.load %arg11[%c0_98, %c0_99] : memref<11x32xf32, #tpu.memory_space<vmem>>, vector<8x32xf32>
    %111 = vector.broadcast %109 : vector<1x32xf32> to vector<8x32xf32>
    %112 = arith.mulf %111, %110 : vector<8x32xf32>
    %113 = arith.addf %108, %112 : vector<8x32xf32>
    %114 = vector.extract_strided_slice %8 {offsets = [1, 0], sizes = [1, 32], strides = [1, 1]} : vector<4x32xf32> to vector<1x32xf32>
    %c1_100 = arith.constant 1 : index
    %c0_101 = arith.constant 0 : index
    %115 = vector.load %arg11[%c1_100, %c0_101] : memref<11x32xf32, #tpu.memory_space<vmem>>, vector<8x32xf32>
    %116 = vector.broadcast %114 : vector<1x32xf32> to vector<8x32xf32>
    %117 = arith.mulf %116, %115 : vector<8x32xf32>
    %118 = arith.addf %113, %117 : vector<8x32xf32>
    %119 = vector.extract_strided_slice %8 {offsets = [2, 0], sizes = [1, 32], strides = [1, 1]} : vector<4x32xf32> to vector<1x32xf32>
    %c2_102 = arith.constant 2 : index
    %c0_103 = arith.constant 0 : index
    %120 = vector.load %arg11[%c2_102, %c0_103] : memref<11x32xf32, #tpu.memory_space<vmem>>, vector<8x32xf32>
    %121 = vector.broadcast %119 : vector<1x32xf32> to vector<8x32xf32>
    %122 = arith.mulf %121, %120 : vector<8x32xf32>
    %123 = arith.addf %118, %122 : vector<8x32xf32>
    %124 = vector.extract_strided_slice %8 {offsets = [3, 0], sizes = [1, 32], strides = [1, 1]} : vector<4x32xf32> to vector<1x32xf32>
    %c3_104 = arith.constant 3 : index
    %c0_105 = arith.constant 0 : index
    %125 = vector.load %arg11[%c3_104, %c0_105] : memref<11x32xf32, #tpu.memory_space<vmem>>, vector<8x32xf32>
    %126 = vector.broadcast %124 : vector<1x32xf32> to vector<8x32xf32>
    %127 = arith.mulf %126, %125 : vector<8x32xf32>
    %128 = arith.addf %123, %127 : vector<8x32xf32>
    %c1_106 = arith.constant 1 : index
    %c0_107 = arith.constant 0 : index
    %c0_108 = arith.constant 0 : index
    %129 = vector.load %arg2[%c1_106, %c0_107, %c0_108] : memref<2x8x32xf32, #tpu.memory_space<vmem>>, vector<1x8x32xf32>
    %130 = vector.shape_cast %129 : vector<1x8x32xf32> to vector<8x32xf32>
    %131 = arith.addf %130, %128 : vector<8x32xf32>
    %c1_109 = arith.constant 1 : index
    %c0_110 = arith.constant 0 : index
    %c0_111 = arith.constant 0 : index
    %132 = vector.load %arg9[%c1_109, %c0_110, %c0_111] : memref<2x8x32xf32, #tpu.memory_space<vmem>>, vector<1x8x32xf32>
    %133 = vector.shape_cast %132 : vector<1x8x32xf32> to vector<8x32xf32>
    %134 = vector.shape_cast %131 : vector<8x32xf32> to vector<1x8x32xf32>
    tpu.vector_store %arg9[%c1_109, %c0_110, %c0_111], %134 {strides = array<i32>} : memref<2x8x32xf32, #tpu.memory_space<vmem>>, vector<1x8x32xf32>,
    return
  }
  func.func @transform_0(%arg0: i32) -> (i32, i32, i32) {
    %c0_i32 = arith.constant 0 : i32
    %c0_i32_0 = arith.constant 0 : i32
    %c0_i32_1 = arith.constant 0 : i32
    return %arg0, %c0_i32, %c0_i32_0 : i32, i32, i32
  }
  func.func @transform_1(%arg0: i32) -> (i32, i32, i32) {
    %c0_i32 = arith.constant 0 : i32
    %c0_i32_0 = arith.constant 0 : i32
    %c0_i32_1 = arith.constant 0 : i32
    return %arg0, %c0_i32, %c0_i32_0 : i32, i32, i32
  }
  func.func @transform_2(%arg0: i32) -> (i32, i32) {
    %c0_i32 = arith.constant 0 : i32
    %c0_i32_0 = arith.constant 0 : i32
    %c0_i32_1 = arith.constant 0 : i32
    return %c0_i32, %c0_i32_0 : i32, i32
  }
  func.func @transform_3(%arg0: i32) -> (i32, i32) {
    %c0_i32 = arith.constant 0 : i32
    %c0_i32_0 = arith.constant 0 : i32
    %c0_i32_1 = arith.constant 0 : i32
    return %c0_i32, %c0_i32_0 : i32, i32
  }
  func.func @transform_4(%arg0: i32) -> (i32, i32) {
    %c0_i32 = arith.constant 0 : i32
    %c0_i32_0 = arith.constant 0 : i32
    %c0_i32_1 = arith.constant 0 : i32
    return %c0_i32, %c0_i32_0 : i32, i32
  }
  func.func @transform_5(%arg0: i32) -> (i32, i32, i32) {
    %c0_i32 = arith.constant 0 : i32
    %c0_i32_0 = arith.constant 0 : i32
    %c0_i32_1 = arith.constant 0 : i32
    %c0_i32_2 = arith.constant 0 : i32
    return %c0_i32, %c0_i32_0, %c0_i32_1 : i32, i32, i32
  }
  func.func @transform_6(%arg0: i32) -> (i32, i32) {
    %c0_i32 = arith.constant 0 : i32
    %c0_i32_0 = arith.constant 0 : i32
    %c0_i32_1 = arith.constant 0 : i32
    return %c0_i32, %c0_i32_0 : i32, i32
  }
  func.func @transform_7(%arg0: i32) -> (i32, i32) {
    %c0_i32 = arith.constant 0 : i32
    %c0_i32_0 = arith.constant 0 : i32
    %c0_i32_1 = arith.constant 0 : i32
    return %c0_i32, %c0_i32_0 : i32, i32
  }
  func.func @transform_8(%arg0: i32) -> (i32, i32, i32) {
    %c0_i32 = arith.constant 0 : i32
    %c0_i32_0 = arith.constant 0 : i32
    %c0_i32_1 = arith.constant 0 : i32
    return %arg0, %c0_i32, %c0_i32_0 : i32, i32, i32
  }
}

</mosaic_0001>

<llo_original>
// kernel: tpu_custom_call.1
$region0: #{tpu_custom_call.1}
  #allocation0 [shape = 'u32[]', space=smem, size = 0x4, offset = 0x4, fixed_abs, tag = 'smem constant byte address 0x4 - core index']
  #allocation1 [shape = 'u32[144,128]{1,0:T(1,128)}', space=vmem, size = 0x12000, scoped, tag = 'internal scratch']
  #allocation2 [shape = 'f32[3,128]{1,0:T(4,128)}', space=vmem, size = 0x800, scoped, tag = 'scratch operand']
  #allocation3 [shape = 'f32[11,32]{1,0:T(8,128)}', space=vmem, size = 0x2000, scoped, tag = 'scratch operand']
  %s0 = inlined_call_operand.vmem [shape: f32[2,2,128], index: 0, kind: input, shape index: {}]
  %s1 = inlined_call_operand.vmem [shape: f32[2,8,32], index: 1, kind: input, shape index: {}]
  %s2 = inlined_call_operand.vmem [shape: f32[128,128], index: 2, kind: input, shape index: {}]
  %s3 = inlined_call_operand.vmem [shape: f32[128,128], index: 3, kind: input, shape index: {}]
  %s4 = inlined_call_operand.vmem [shape: f32[1,128], index: 4, kind: input, shape index: {}]
  %s5 = inlined_call_operand.vmem [shape: f32[4,128,32], index: 5, kind: input, shape index: {}]
  %s6 = inlined_call_operand.vmem [shape: f32[1,32], index: 6, kind: input, shape index: {}]
  %s7 = inlined_call_operand.vmem [shape: f32[4,32], index: 7, kind: input, shape index: {}]
  %s8 = inlined_call_operand.hbm [shape: f32[2,8,32], index: 8, kind: output, shape index: {}]
  %s9 = sld [smem:[#allocation0]]
  $region42: #{tpu_custom_call.1} parent=0
    _
  %s11 = ssub.s32 1, %s9
  %s12 = scalar_select 0, %s11, %s9
  $region1: #{tpu_custom_call.1} parent=0
    #allocation4 [shape = 'u8[8192]{0}', space=vmem, size = 0x2000, scoped, tag = 'output window, operand 0, single buffered']
    #allocation5 [shape = 's32[1]{0}', space=sflag, size = 0x4, scoped, tag = 'scoped memory for tpu_custom_call.1']
    %13 = vsyncpa [#allocation5], 0
    // Predicated region
    $region2: #{tpu_custom_call.1} parent=1 // pred_check
      _
    $region3: #{tpu_custom_call.1} parent=1 // pred_check_branch
      %15 = sbr.rel (0) target = $region5
    $region4: #{tpu_custom_call.1} parent=1 // pred_region
      _
    $region5: #{tpu_custom_call.1} parent=1 // pred_fallthru
      _
    // Predicated region
    $region6: #{tpu_custom_call.1} parent=1 // pred_check
      _
    $region7: #{tpu_custom_call.1} parent=1 // pred_check_branch
      %17 = sbr.rel (0) target = $region9
    $region8: #{tpu_custom_call.1} parent=1 // pred_region
      _
    $region9: #{tpu_custom_call.1} parent=1 // pred_fallthru
      _
    // Predicated region
    $region10: #{tpu_custom_call.1} parent=1 // pred_check
      _
    $region11: #{tpu_custom_call.1} parent=1 // pred_check_branch
      %19 = sbr.rel (0) target = $region13
    $region12: #{tpu_custom_call.1} parent=1 // pred_region
      _
    $region13: #{tpu_custom_call.1} parent=1 // pred_fallthru
      _
    // Predicated region
    $region14: #{tpu_custom_call.1} parent=1 // pred_check
      _
    $region15: #{tpu_custom_call.1} parent=1 // pred_check_branch
      %21 = sbr.rel (0) target = $region17
    $region16: #{tpu_custom_call.1} parent=1 // pred_region
      _
    $region17: #{tpu_custom_call.1} parent=1 // pred_fallthru
      _
    // Predicated region
    $region18: #{tpu_custom_call.1} parent=1 // pred_check
      _
    $region19: #{tpu_custom_call.1} parent=1 // pred_check_branch
      %23 = sbr.rel (0) target = $region21
    $region20: #{tpu_custom_call.1} parent=1 // pred_region
      _
    $region21: #{tpu_custom_call.1} parent=1 // pred_fallthru
      _
    // Predicated region
    $region22: #{tpu_custom_call.1} parent=1 // pred_check
      _
    $region23: #{tpu_custom_call.1} parent=1 // pred_check_branch
      %25 = sbr.rel (0) target = $region25
    $region24: #{tpu_custom_call.1} parent=1 // pred_region
      _
    $region25: #{tpu_custom_call.1} parent=1 // pred_fallthru
      _
    // Predicated region
    $region26: #{tpu_custom_call.1} parent=1 // pred_check
      _
    $region27: #{tpu_custom_call.1} parent=1 // pred_check_branch
      %27 = sbr.rel (0) target = $region29
    $region28: #{tpu_custom_call.1} parent=1 // pred_region
      _
    $region29: #{tpu_custom_call.1} parent=1 // pred_fallthru
      _
    // Predicated region
    $region30: #{tpu_custom_call.1} parent=1 // pred_check
      _
    $region31: #{tpu_custom_call.1} parent=1 // pred_check_branch
      %29 = sbr.rel (0) target = $region33
    $region32: #{tpu_custom_call.1} parent=1 // pred_region
      _
    $region33: #{tpu_custom_call.1} parent=1 // pred_fallthru
      _
    %30 = vst [vmem:[#allocation2] sm:$0x1] 0.0
    %vm31 = vcmask 256000
    %32 = vst.msk [vmem:[#allocation3] sm:$0x7] %vm31, 0.0
    %v33 = vld [vmem:[%s2] sm:$0xff]
    %v34 = vld [vmem:[%s2 + $0x8] sm:$0xff]
    %v35 = vld [vmem:[%s2 + $0x10] sm:$0xff]
    %v36 = vld [vmem:[%s2 + $0x18] sm:$0xff]
    %v37 = vld [vmem:[%s2 + $0x20] sm:$0xff]
    %v38 = vld [vmem:[%s2 + $0x28] sm:$0xff]
    %v39 = vld [vmem:[%s2 + $0x30] sm:$0xff]
    %v40 = vld [vmem:[%s2 + $0x38] sm:$0xff]
    %v41 = vld [vmem:[%s2 + $0x40] sm:$0xff]
    %v42 = vld [vmem:[%s2 + $0x48] sm:$0xff]
    %v43 = vld [vmem:[%s2 + $0x50] sm:$0xff]
    %v44 = vld [vmem:[%s2 + $0x58] sm:$0xff]
    %v45 = vld [vmem:[%s2 + $0x60] sm:$0xff]
    %v46 = vld [vmem:[%s2 + $0x68] sm:$0xff]
    %v47 = vld [vmem:[%s2 + $0x70] sm:$0xff]
    %v48 = vld [vmem:[%s2 + $0x78] sm:$0xff]
    %v49 = vld [vmem:[%s3] sm:$0xff]
    %v50 = vld [vmem:[%s3 + $0x8] sm:$0xff]
    %v51 = vld [vmem:[%s3 + $0x10] sm:$0xff]
    %v52 = vld [vmem:[%s3 + $0x18] sm:$0xff]
    %v53 = vld [vmem:[%s3 + $0x20] sm:$0xff]
    %v54 = vld [vmem:[%s3 + $0x28] sm:$0xff]
    %v55 = vld [vmem:[%s3 + $0x30] sm:$0xff]
    %v56 = vld [vmem:[%s3 + $0x38] sm:$0xff]
    %v57 = vld [vmem:[%s3 + $0x40] sm:$0xff]
    %v58 = vld [vmem:[%s3 + $0x48] sm:$0xff]
    %v59 = vld [vmem:[%s3 + $0x50] sm:$0xff]
    %v60 = vld [vmem:[%s3 + $0x58] sm:$0xff]
    %v61 = vld [vmem:[%s3 + $0x60] sm:$0xff]
    %v62 = vld [vmem:[%s3 + $0x68] sm:$0xff]
    %v63 = vld [vmem:[%s3 + $0x70] sm:$0xff]
    %v64 = vld [vmem:[%s3 + $0x78] sm:$0xff]
    %v65 = vld [vmem:[%s4] sm:$0x1]
    %v66 = vld [vmem:[%s6] sm:$0x1]
    %v67 = vld [vmem:[%s7] sm:$0xf]
    %v68 = vld [vmem:[%s0] sm:$0x3]
    %69 = vst [vmem:[#allocation2 + $0x1] sm:$0x3] %v68
    %v70 = vld [vmem:[#allocation2] sm:$0x3]
    %v71 = vld [vmem:[#allocation2 + $0x1] sm:$0x3]
    %72 = vmatprep.subr.mxu0 0.0
    %73 = vmatpush1.msra.mxu0 %v64
    %74 = vmatprep.subr.mxu0 0.0
    %75 = vmatpush1.msra.mxu0 %v63
    %76 = vmatprep.subr.mxu0 0.0
    %77 = vmatpush1.msra.mxu0 %v62
    %78 = vmatprep.subr.mxu0 0.0
    %79 = vmatpush1.msra.mxu0 %v61
    %80 = vmatprep.subr.mxu0 0.0
    %81 = vmatpush1.msra.mxu0 %v60
    %82 = vmatprep.subr.mxu0 0.0
    %83 = vmatpush1.msra.mxu0 %v59
    %84 = vmatprep.subr.mxu0 0.0
    %85 = vmatpush1.msra.mxu0 %v58
    %86 = vmatprep.subr.mxu0 0.0
    %87 = vmatpush1.msra.mxu0 %v57
    %88 = vmatprep.subr.mxu0 0.0
    %89 = vmatpush1.msra.mxu0 %v56
    %90 = vmatprep.subr.mxu0 0.0
    %91 = vmatpush1.msra.mxu0 %v55
    %92 = vmatprep.subr.mxu0 0.0
    %93 = vmatpush1.msra.mxu0 %v54
    %94 = vmatprep.subr.mxu0 0.0
    %95 = vmatpush1.msra.mxu0 %v53
    %96 = vmatprep.subr.mxu0 0.0
    %97 = vmatpush1.msra.mxu0 %v52
    %98 = vmatprep.subr.mxu0 0.0
    %99 = vmatpush1.msra.mxu0 %v51
    %100 = vmatprep.subr.mxu0 0.0
    %101 = vmatpush1.msra.mxu0 %v50
    %102 = vmatprep.subr.mxu0 0.0
    %103 = vmatpush1.msra.mxu0 %v49
    %104 = vmatprep.subr.mxu0 0.0
    %105 = vmatpush2.msra.mxu0 0.0
    %106 = vmatprep.subr.mxu0 0.0
    %107 = vmatpush2.msra.mxu0 0.0
    %108 = vmatprep.subr.mxu0 0.0
    %109 = vmatpush2.msra.mxu0 0.0
    %110 = vmatprep.subr.mxu0 0.0
    %111 = vmatpush2.msra.mxu0 0.0
    %112 = vmatprep.subr.mxu0 0.0
    %113 = vmatpush2.msra.mxu0 0.0
    %114 = vmatprep.subr.mxu0 0.0
    %115 = vmatpush2.msra.mxu0 0.0
    %116 = vmatprep.subr.mxu0 0.0
    %117 = vmatpush2.msra.mxu0 0.0
    %118 = vmatprep.subr.mxu0 0.0
    %119 = vmatpush2.msra.mxu0 0.0
    %120 = vmatprep.subr.mxu0 0.0
    %121 = vmatpush2.msra.mxu0 0.0
    %122 = vmatprep.subr.mxu0 0.0
    %123 = vmatpush2.msra.mxu0 0.0
    %124 = vmatprep.subr.mxu0 0.0
    %125 = vmatpush2.msra.mxu0 0.0
    %126 = vmatprep.subr.mxu0 0.0
    %127 = vmatpush2.msra.mxu0 0.0
    %128 = vmatprep.subr.mxu0 0.0
    %129 = vmatpush2.msra.mxu0 0.0
    %130 = vmatprep.subr.mxu0 0.0
    %131 = vmatpush2.msra.mxu0 0.0
    %132 = vmatprep.subr.mxu0 0.0
    %133 = vmatpush2.msra.mxu0 0.0
    %134 = vmatprep.subr.mxu0 0.0
    %135 = vmatpush2.msra.mxu0 0.0
    %136 = vmatprep.mubr.f32.mxu0 0.0
    %137 = vmatmul.mubr.f32.gmra.mxu0 %v71
    %v138 = vpop.f32.mrf.mxu0
    %v139 = vadd.f32 0.0, %v138
    %v140 = vpop.f32.mrf.mxu0
    %141 = vdwg.mxu0
    %142 = vmatprep.subr.mxu0 0.0
    %143 = vmatpush1.msra.mxu0 %v48
    %144 = vmatprep.subr.mxu0 0.0
    %145 = vmatpush1.msra.mxu0 %v47
    %146 = vmatprep.subr.mxu0 0.0
    %147 = vmatpush1.msra.mxu0 %v46
    %148 = vmatprep.subr.mxu0 0.0
    %149 = vmatpush1.msra.mxu0 %v45
    %150 = vmatprep.subr.mxu0 0.0
    %151 = vmatpush1.msra.mxu0 %v44
    %152 = vmatprep.subr.mxu0 0.0
    %153 = vmatpush1.msra.mxu0 %v43
    %154 = vmatprep.subr.mxu0 0.0
    %155 = vmatpush1.msra.mxu0 %v42
    %156 = vmatprep.subr.mxu0 0.0
    %157 = vmatpush1.msra.mxu0 %v41
    %158 = vmatprep.subr.mxu0 0.0
    %159 = vmatpush1.msra.mxu0 %v40
    %160 = vmatprep.subr.mxu0 0.0
    %161 = vmatpush1.msra.mxu0 %v39
    %162 = vmatprep.subr.mxu0 0.0
    %163 = vmatpush1.msra.mxu0 %v38
    %164 = vmatprep.subr.mxu0 0.0
    %165 = vmatpush1.msra.mxu0 %v37
    %166 = vmatprep.subr.mxu0 0.0
    %167 = vmatpush1.msra.mxu0 %v36
    %168 = vmatprep.subr.mxu0 0.0
    %169 = vmatpush1.msra.mxu0 %v35
    %170 = vmatprep.subr.mxu0 0.0
    %171 = vmatpush1.msra.mxu0 %v34
    %172 = vmatprep.subr.mxu0 0.0
    %173 = vmatpush1.msra.mxu0 %v33
    %174 = vmatprep.subr.mxu0 0.0
    %175 = vmatpush2.msra.mxu0 0.0
    %176 = vmatprep.subr.mxu0 0.0
    %177 = vmatpush2.msra.mxu0 0.0
    %178 = vmatprep.subr.mxu0 0.0
    %179 = vmatpush2.msra.mxu0 0.0
    %180 = vmatprep.subr.mxu0 0.0
    %181 = vmatpush2.msra.mxu0 0.0
    %182 = vmatprep.subr.mxu0 0.0
    %183 = vmatpush2.msra.mxu0 0.0
    %184 = vmatprep.subr.mxu0 0.0
    %185 = vmatpush2.msra.mxu0 0.0
    %186 = vmatprep.subr.mxu0 0.0
    %187 = vmatpush2.msra.mxu0 0.0
    %188 = vmatprep.subr.mxu0 0.0
    %189 = vmatpush2.msra.mxu0 0.0
    %190 = vmatprep.subr.mxu0 0.0
    %191 = vmatpush2.msra.mxu0 0.0
    %192 = vmatprep.subr.mxu0 0.0
    %193 = vmatpush2.msra.mxu0 0.0
    %194 = vmatprep.subr.mxu0 0.0
    %195 = vmatpush2.msra.mxu0 0.0
    %196 = vmatprep.subr.mxu0 0.0
    %197 = vmatpush2.msra.mxu0 0.0
    %198 = vmatprep.subr.mxu0 0.0
    %199 = vmatpush2.msra.mxu0 0.0
    %200 = vmatprep.subr.mxu0 0.0
    %201 = vmatpush2.msra.mxu0 0.0
    %202 = vmatprep.subr.mxu0 0.0
    %203 = vmatpush2.msra.mxu0 0.0
    %204 = vmatprep.subr.mxu0 0.0
    %205 = vmatpush2.msra.mxu0 0.0
    %206 = vmatprep.mubr.f32.mxu0 0.0
    %207 = vmatmul.mubr.f32.gmra.mxu0 %v70
    %v208 = vpop.f32.mrf.mxu0
    %v209 = vadd.f32 %v139, %v208
    %v210 = vpop.f32.mrf.mxu0
    %211 = vdwg.mxu0
    %v213 = vlaneseq
    %v214 = vshrl.u32 %v213, 7
    %v215 = vsub.s32 0, %v214
    %v216 = vrot.slane %v65, %v215
    %v218 = vadd.f32 %v209, %v216
    %v219 = vmax.f32 %v218, 0.0
    %v220 = vld [vmem:[%s5] sm:$0xff]
    %v221 = vld [vmem:[%s5 + $0x8] sm:$0xff]
    %v222 = vld [vmem:[%s5 + $0x10] sm:$0xff]
    %v223 = vld [vmem:[%s5 + $0x18] sm:$0xff]
    %v224 = vld [vmem:[%s5 + $0x20] sm:$0xff]
    %v225 = vld [vmem:[%s5 + $0x28] sm:$0xff]
    %v226 = vld [vmem:[%s5 + $0x30] sm:$0xff]
    %v227 = vld [vmem:[%s5 + $0x38] sm:$0xff]
    %v228 = vld [vmem:[%s5 + $0x40] sm:$0xff]
    %v229 = vld [vmem:[%s5 + $0x48] sm:$0xff]
    %v230 = vld [vmem:[%s5 + $0x50] sm:$0xff]
    %v231 = vld [vmem:[%s5 + $0x58] sm:$0xff]
    %v232 = vld [vmem:[%s5 + $0x60] sm:$0xff]
    %v233 = vld [vmem:[%s5 + $0x68] sm:$0xff]
    %v234 = vld [vmem:[%s5 + $0x70] sm:$0xff]
    %v235 = vld [vmem:[%s5 + $0x78] sm:$0xff]
    %v237 = vlaneseq
    %v238 = vshrl.u32 %v237, 7
    %v239 = vsub.s32 0, %v238
    %v240 = vrot.slane %v66, %v239
    %242 = vmatprep.subr.mxu0 0.0
    %243 = vmatpush1.msra.mxu0 %v235
    %244 = vmatprep.subr.mxu0 0.0
    %245 = vmatpush1.msra.mxu0 %v234
    %246 = vmatprep.subr.mxu0 0.0
    %247 = vmatpush1.msra.mxu0 %v233
    %248 = vmatprep.subr.mxu0 0.0
    %249 = vmatpush1.msra.mxu0 %v232
    %250 = vmatprep.subr.mxu0 0.0
    %251 = vmatpush1.msra.mxu0 %v231
    %252 = vmatprep.subr.mxu0 0.0
    %253 = vmatpush1.msra.mxu0 %v230
    %254 = vmatprep.subr.mxu0 0.0
    %255 = vmatpush1.msra.mxu0 %v229
    %256 = vmatprep.subr.mxu0 0.0
    %257 = vmatpush1.msra.mxu0 %v228
    %258 = vmatprep.subr.mxu0 0.0
    %259 = vmatpush1.msra.mxu0 %v227
    %260 = vmatprep.subr.mxu0 0.0
    %261 = vmatpush1.msra.mxu0 %v226
    %262 = vmatprep.subr.mxu0 0.0
    %263 = vmatpush1.msra.mxu0 %v225
    %264 = vmatprep.subr.mxu0 0.0
    %265 = vmatpush1.msra.mxu0 %v224
    %266 = vmatprep.subr.mxu0 0.0
    %267 = vmatpush1.msra.mxu0 %v223
    %268 = vmatprep.subr.mxu0 0.0
    %269 = vmatpush1.msra.mxu0 %v222
    %270 = vmatprep.subr.mxu0 0.0
    %271 = vmatpush1.msra.mxu0 %v221
    %272 = vmatprep.subr.mxu0 0.0
    %273 = vmatpush1.msra.mxu0 %v220
    %274 = vmatprep.subr.mxu0 0.0
    %275 = vmatpush2.msra.mxu0 0.0
    %276 = vmatprep.subr.mxu0 0.0
    %277 = vmatpush2.msra.mxu0 0.0
    %278 = vmatprep.subr.mxu0 0.0
    %279 = vmatpush2.msra.mxu0 0.0
    %280 = vmatprep.subr.mxu0 0.0
    %281 = vmatpush2.msra.mxu0 0.0
    %282 = vmatprep.subr.mxu0 0.0
    %283 = vmatpush2.msra.mxu0 0.0
    %284 = vmatprep.subr.mxu0 0.0
    %285 = vmatpush2.msra.mxu0 0.0
    %286 = vmatprep.subr.mxu0 0.0
    %287 = vmatpush2.msra.mxu0 0.0
    %288 = vmatprep.subr.mxu0 0.0
    %289 = vmatpush2.msra.mxu0 0.0
    %290 = vmatprep.subr.mxu0 0.0
    %291 = vmatpush2.msra.mxu0 0.0
    %292 = vmatprep.subr.mxu0 0.0
    %293 = vmatpush2.msra.mxu0 0.0
    %294 = vmatprep.subr.mxu0 0.0
    %295 = vmatpush2.msra.mxu0 0.0
    %296 = vmatprep.subr.mxu0 0.0
    %297 = vmatpush2.msra.mxu0 0.0
    %298 = vmatprep.subr.mxu0 0.0
    %299 = vmatpush2.msra.mxu0 0.0
    %300 = vmatprep.subr.mxu0 0.0
    %301 = vmatpush2.msra.mxu0 0.0
    %302 = vmatprep.subr.mxu0 0.0
    %303 = vmatpush2.msra.mxu0 0.0
    %304 = vmatprep.subr.mxu0 0.0
    %305 = vmatpush2.msra.mxu0 0.0
    %306 = vmatprep.mubr.f32.mxu0 0.0
    %307 = vmatmul.mubr.f32.gmra.mxu0 %v219
    %v308 = vpop.f32.mrf.mxu0
    %v309 = vadd.f32 %v240, %v308
    %v310 = vpop.f32.mrf.mxu0
    %311 = vdwg.mxu0
    %vm312 = vcmask 254976
    %313 = vst.msk [vmem:[#allocation3 + $0x3] sm:$0x3] %vm312, %v309
    %s314 = scalar_lea.vmem %s5, 128
    %v315 = vld [vmem:[%s314] sm:$0xff]
    %v316 = vld [vmem:[%s314 + $0x8] sm:$0xff]
    %v317 = vld [vmem:[%s314 + $0x10] sm:$0xff]
    %v318 = vld [vmem:[%s314 + $0x18] sm:$0xff]
    %v319 = vld [vmem:[%s314 + $0x20] sm:$0xff]
    %v320 = vld [vmem:[%s314 + $0x28] sm:$0xff]
    %v321 = vld [vmem:[%s314 + $0x30] sm:$0xff]
    %v322 = vld [vmem:[%s314 + $0x38] sm:$0xff]
    %v323 = vld [vmem:[%s314 + $0x40] sm:$0xff]
    %v324 = vld [vmem:[%s314 + $0x48] sm:$0xff]
    %v325 = vld [vmem:[%s314 + $0x50] sm:$0xff]
    %v326 = vld [vmem:[%s314 + $0x58] sm:$0xff]
    %v327 = vld [vmem:[%s314 + $0x60] sm:$0xff]
    %v328 = vld [vmem:[%s314 + $0x68] sm:$0xff]
    %v329 = vld [vmem:[%s314 + $0x70] sm:$0xff]
    %v330 = vld [vmem:[%s314 + $0x78] sm:$0xff]
    %331 = vmatprep.subr.mxu0 0.0
    %332 = vmatpush1.msra.mxu0 %v330
    %333 = vmatprep.subr.mxu0 0.0
    %334 = vmatpush1.msra.mxu0 %v329
    %335 = vmatprep.subr.mxu0 0.0
    %336 = vmatpush1.msra.mxu0 %v328
    %337 = vmatprep.subr.mxu0 0.0
    %338 = vmatpush1.msra.mxu0 %v327
    %339 = vmatprep.subr.mxu0 0.0
    %340 = vmatpush1.msra.mxu0 %v326
    %341 = vmatprep.subr.mxu0 0.0
    %342 = vmatpush1.msra.mxu0 %v325
    %343 = vmatprep.subr.mxu0 0.0
    %344 = vmatpush1.msra.mxu0 %v324
    %345 = vmatprep.subr.mxu0 0.0
    %346 = vmatpush1.msra.mxu0 %v323
    %347 = vmatprep.subr.mxu0 0.0
    %348 = vmatpush1.msra.mxu0 %v322
    %349 = vmatprep.subr.mxu0 0.0
    %350 = vmatpush1.msra.mxu0 %v321
    %351 = vmatprep.subr.mxu0 0.0
    %352 = vmatpush1.msra.mxu0 %v320
    %353 = vmatprep.subr.mxu0 0.0
    %354 = vmatpush1.msra.mxu0 %v319
    %355 = vmatprep.subr.mxu0 0.0
    %356 = vmatpush1.msra.mxu0 %v318
    %357 = vmatprep.subr.mxu0 0.0
    %358 = vmatpush1.msra.mxu0 %v317
    %359 = vmatprep.subr.mxu0 0.0
    %360 = vmatpush1.msra.mxu0 %v316
    %361 = vmatprep.subr.mxu0 0.0
    %362 = vmatpush1.msra.mxu0 %v315
    %363 = vmatprep.subr.mxu0 0.0
    %364 = vmatpush2.msra.mxu0 0.0
    %365 = vmatprep.subr.mxu0 0.0
    %366 = vmatpush2.msra.mxu0 0.0
    %367 = vmatprep.subr.mxu0 0.0
    %368 = vmatpush2.msra.mxu0 0.0
    %369 = vmatprep.subr.mxu0 0.0
    %370 = vmatpush2.msra.mxu0 0.0
    %371 = vmatprep.subr.mxu0 0.0
    %372 = vmatpush2.msra.mxu0 0.0
    %373 = vmatprep.subr.mxu0 0.0
    %374 = vmatpush2.msra.mxu0 0.0
    %375 = vmatprep.subr.mxu0 0.0
    %376 = vmatpush2.msra.mxu0 0.0
    %377 = vmatprep.subr.mxu0 0.0
    %378 = vmatpush2.msra.mxu0 0.0
    %379 = vmatprep.subr.mxu0 0.0
    %380 = vmatpush2.msra.mxu0 0.0
    %381 = vmatprep.subr.mxu0 0.0
    %382 = vmatpush2.msra.mxu0 0.0
    %383 = vmatprep.subr.mxu0 0.0
    %384 = vmatpush2.msra.mxu0 0.0
    %385 = vmatprep.subr.mxu0 0.0
    %386 = vmatpush2.msra.mxu0 0.0
    %387 = vmatprep.subr.mxu0 0.0
    %388 = vmatpush2.msra.mxu0 0.0
    %389 = vmatprep.subr.mxu0 0.0
    %390 = vmatpush2.msra.mxu0 0.0
    %391 = vmatprep.subr.mxu0 0.0
    %392 = vmatpush2.msra.mxu0 0.0
    %393 = vmatprep.subr.mxu0 0.0
    %394 = vmatpush2.msra.mxu0 0.0
    %395 = vmatprep.mubr.f32.mxu0 0.0
    %396 = vmatmul.mubr.f32.gmra.mxu0 %v219
    %v397 = vpop.f32.mrf.mxu0
    %v398 = vadd.f32 %v240, %v397
    %v399 = vpop.f32.mrf.mxu0
    %400 = vdwg.mxu0
    %401 = vst.msk [vmem:[#allocation3 + $0x5] sm:$0x3] %vm312, %v398
    %s402 = scalar_lea.vmem %s5, 256
    %v403 = vld [vmem:[%s402] sm:$0xff]
    %v404 = vld [vmem:[%s402 + $0x8] sm:$0xff]
    %v405 = vld [vmem:[%s402 + $0x10] sm:$0xff]
    %v406 = vld [vmem:[%s402 + $0x18] sm:$0xff]
    %v407 = vld [vmem:[%s402 + $0x20] sm:$0xff]
    %v408 = vld [vmem:[%s402 + $0x28] sm:$0xff]
    %v409 = vld [vmem:[%s402 + $0x30] sm:$0xff]
    %v410 = vld [vmem:[%s402 + $0x38] sm:$0xff]
    %v411 = vld [vmem:[%s402 + $0x40] sm:$0xff]
    %v412 = vld [vmem:[%s402 + $0x48] sm:$0xff]
    %v413 = vld [vmem:[%s402 + $0x50] sm:$0xff]
    %v414 = vld [vmem:[%s402 + $0x58] sm:$0xff]
    %v415 = vld [vmem:[%s402 + $0x60] sm:$0xff]
    %v416 = vld [vmem:[%s402 + $0x68] sm:$0xff]
    %v417 = vld [vmem:[%s402 + $0x70] sm:$0xff]
    %v418 = vld [vmem:[%s402 + $0x78] sm:$0xff]
    %419 = vmatprep.subr.mxu0 0.0
    %420 = vmatpush1.msra.mxu0 %v418
    %421 = vmatprep.subr.mxu0 0.0
    %422 = vmatpush1.msra.mxu0 %v417
    %423 = vmatprep.subr.mxu0 0.0
    %424 = vmatpush1.msra.mxu0 %v416
    %425 = vmatprep.subr.mxu0 0.0
    %426 = vmatpush1.msra.mxu0 %v415
    %427 = vmatprep.subr.mxu0 0.0
    %428 = vmatpush1.msra.mxu0 %v414
    %429 = vmatprep.subr.mxu0 0.0
    %430 = vmatpush1.msra.mxu0 %v413
    %431 = vmatprep.subr.mxu0 0.0
    %432 = vmatpush1.msra.mxu0 %v412
    %433 = vmatprep.subr.mxu0 0.0
    %434 = vmatpush1.msra.mxu0 %v411
    %435 = vmatprep.subr.mxu0 0.0
    %436 = vmatpush1.msra.mxu0 %v410
    %437 = vmatprep.subr.mxu0 0.0
    %438 = vmatpush1.msra.mxu0 %v409
    %439 = vmatprep.subr.mxu0 0.0
    %440 = vmatpush1.msra.mxu0 %v408
    %441 = vmatprep.subr.mxu0 0.0
    %442 = vmatpush1.msra.mxu0 %v407
    %443 = vmatprep.subr.mxu0 0.0
    %444 = vmatpush1.msra.mxu0 %v406
    %445 = vmatprep.subr.mxu0 0.0
    %446 = vmatpush1.msra.mxu0 %v405
    %447 = vmatprep.subr.mxu0 0.0
    %448 = vmatpush1.msra.mxu0 %v404
    %449 = vmatprep.subr.mxu0 0.0
    %450 = vmatpush1.msra.mxu0 %v403
    %451 = vmatprep.subr.mxu0 0.0
    %452 = vmatpush2.msra.mxu0 0.0
    %453 = vmatprep.subr.mxu0 0.0
    %454 = vmatpush2.msra.mxu0 0.0
    %455 = vmatprep.subr.mxu0 0.0
    %456 = vmatpush2.msra.mxu0 0.0
    %457 = vmatprep.subr.mxu0 0.0
    %458 = vmatpush2.msra.mxu0 0.0
    %459 = vmatprep.subr.mxu0 0.0
    %460 = vmatpush2.msra.mxu0 0.0
    %461 = vmatprep.subr.mxu0 0.0
    %462 = vmatpush2.msra.mxu0 0.0
    %463 = vmatprep.subr.mxu0 0.0
    %464 = vmatpush2.msra.mxu0 0.0
    %465 = vmatprep.subr.mxu0 0.0
    %466 = vmatpush2.msra.mxu0 0.0
    %467 = vmatprep.subr.mxu0 0.0
    %468 = vmatpush2.msra.mxu0 0.0
    %469 = vmatprep.subr.mxu0 0.0
    %470 = vmatpush2.msra.mxu0 0.0
    %471 = vmatprep.subr.mxu0 0.0
    %472 = vmatpush2.msra.mxu0 0.0
    %473 = vmatprep.subr.mxu0 0.0
    %474 = vmatpush2.msra.mxu0 0.0
    %475 = vmatprep.subr.mxu0 0.0
    %476 = vmatpush2.msra.mxu0 0.0
    %477 = vmatprep.subr.mxu0 0.0
    %478 = vmatpush2.msra.mxu0 0.0
    %479 = vmatprep.subr.mxu0 0.0
    %480 = vmatpush2.msra.mxu0 0.0
    %481 = vmatprep.subr.mxu0 0.0
    %482 = vmatpush2.msra.mxu0 0.0
    %483 = vmatprep.mubr.f32.mxu0 0.0
    %484 = vmatmul.mubr.f32.gmra.mxu0 %v219
    %v485 = vpop.f32.mrf.mxu0
    %v486 = vadd.f32 %v240, %v485
    %v487 = vpop.f32.mrf.mxu0
    %488 = vdwg.mxu0
    %489 = vst.msk [vmem:[#allocation3 + $0x7] sm:$0x3] %vm312, %v486
    %s490 = scalar_lea.vmem %s5, 384
    %v491 = vld [vmem:[%s490] sm:$0xff]
    %v492 = vld [vmem:[%s490 + $0x8] sm:$0xff]
    %v493 = vld [vmem:[%s490 + $0x10] sm:$0xff]
    %v494 = vld [vmem:[%s490 + $0x18] sm:$0xff]
    %v495 = vld [vmem:[%s490 + $0x20] sm:$0xff]
    %v496 = vld [vmem:[%s490 + $0x28] sm:$0xff]
    %v497 = vld [vmem:[%s490 + $0x30] sm:$0xff]
    %v498 = vld [vmem:[%s490 + $0x38] sm:$0xff]
    %v499 = vld [vmem:[%s490 + $0x40] sm:$0xff]
    %v500 = vld [vmem:[%s490 + $0x48] sm:$0xff]
    %v501 = vld [vmem:[%s490 + $0x50] sm:$0xff]
    %v502 = vld [vmem:[%s490 + $0x58] sm:$0xff]
    %v503 = vld [vmem:[%s490 + $0x60] sm:$0xff]
    %v504 = vld [vmem:[%s490 + $0x68] sm:$0xff]
    %v505 = vld [vmem:[%s490 + $0x70] sm:$0xff]
    %v506 = vld [vmem:[%s490 + $0x78] sm:$0xff]
    %507 = vmatprep.subr.mxu0 0.0
    %508 = vmatpush1.msra.mxu0 %v506
    %509 = vmatprep.subr.mxu0 0.0
    %510 = vmatpush1.msra.mxu0 %v505
    %511 = vmatprep.subr.mxu0 0.0
    %512 = vmatpush1.msra.mxu0 %v504
    %513 = vmatprep.subr.mxu0 0.0
    %514 = vmatpush1.msra.mxu0 %v503
    %515 = vmatprep.subr.mxu0 0.0
    %516 = vmatpush1.msra.mxu0 %v502
    %517 = vmatprep.subr.mxu0 0.0
    %518 = vmatpush1.msra.mxu0 %v501
    %519 = vmatprep.subr.mxu0 0.0
    %520 = vmatpush1.msra.mxu0 %v500
    %521 = vmatprep.subr.mxu0 0.0
    %522 = vmatpush1.msra.mxu0 %v499
    %523 = vmatprep.subr.mxu0 0.0
    %524 = vmatpush1.msra.mxu0 %v498
    %525 = vmatprep.subr.mxu0 0.0
    %526 = vmatpush1.msra.mxu0 %v497
    %527 = vmatprep.subr.mxu0 0.0
    %528 = vmatpush1.msra.mxu0 %v496
    %529 = vmatprep.subr.mxu0 0.0
    %530 = vmatpush1.msra.mxu0 %v495
    %531 = vmatprep.subr.mxu0 0.0
    %532 = vmatpush1.msra.mxu0 %v494
    %533 = vmatprep.subr.mxu0 0.0
    %534 = vmatpush1.msra.mxu0 %v493
    %535 = vmatprep.subr.mxu0 0.0
    %536 = vmatpush1.msra.mxu0 %v492
    %537 = vmatprep.subr.mxu0 0.0
    %538 = vmatpush1.msra.mxu0 %v491
    %539 = vmatprep.subr.mxu0 0.0
    %540 = vmatpush2.msra.mxu0 0.0
    %541 = vmatprep.subr.mxu0 0.0
    %542 = vmatpush2.msra.mxu0 0.0
    %543 = vmatprep.subr.mxu0 0.0
    %544 = vmatpush2.msra.mxu0 0.0
    %545 = vmatprep.subr.mxu0 0.0
    %546 = vmatpush2.msra.mxu0 0.0
    %547 = vmatprep.subr.mxu0 0.0
    %548 = vmatpush2.msra.mxu0 0.0
    %549 = vmatprep.subr.mxu0 0.0
    %550 = vmatpush2.msra.mxu0 0.0
    %551 = vmatprep.subr.mxu0 0.0
    %552 = vmatpush2.msra.mxu0 0.0
    %553 = vmatprep.subr.mxu0 0.0
    %554 = vmatpush2.msra.mxu0 0.0
    %555 = vmatprep.subr.mxu0 0.0
    %556 = vmatpush2.msra.mxu0 0.0
    %557 = vmatprep.subr.mxu0 0.0
    %558 = vmatpush2.msra.mxu0 0.0
    %559 = vmatprep.subr.mxu0 0.0
    %560 = vmatpush2.msra.mxu0 0.0
    %561 = vmatprep.subr.mxu0 0.0
    %562 = vmatpush2.msra.mxu0 0.0
    %563 = vmatprep.subr.mxu0 0.0
    %564 = vmatpush2.msra.mxu0 0.0
    %565 = vmatprep.subr.mxu0 0.0
    %566 = vmatpush2.msra.mxu0 0.0
    %567 = vmatprep.subr.mxu0 0.0
    %568 = vmatpush2.msra.mxu0 0.0
    %569 = vmatprep.subr.mxu0 0.0
    %570 = vmatpush2.msra.mxu0 0.0
    %571 = vmatprep.mubr.f32.mxu0 0.0
    %572 = vmatmul.mubr.f32.gmra.mxu0 %v219
    %v573 = vpop.f32.mrf.mxu0
    %v574 = vadd.f32 %v240, %v573
    %v575 = vpop.f32.mrf.mxu0
    %576 = vdwg.mxu0
    %577 = vst.msk [vmem:[#allocation3 + $0x9] sm:$0x3] %vm312, %v574
    %v578 = vld [vmem:[#allocation3 + $0x3] sm:$0xff]
    %v579 = vld [vmem:[#allocation3] sm:$0xff]
    %v580 = vlaneseq
    %v581 = vshrl.u32 %v580, 7
    %v582 = vsub.s32 0, %v581
    %v583 = vrot.slane %v67, %v582
    %v584 = vmul.f32 %v583, %v579
    %v585 = vadd.f32 %v578, %v584
    %v586 = vld [vmem:[#allocation3 + $0x1] sm:$0xff]
    %v587 = vlaneseq
    %v588 = vshrl.u32 %v587, 7
    %v589 = vsub.s32 1, %v588
    %v590 = vrot.slane %v67, %v589
    %v591 = vmul.f32 %v590, %v586
    %v592 = vadd.f32 %v585, %v591
    %v593 = vld [vmem:[#allocation3 + $0x2] sm:$0xff]
    %v594 = vlaneseq
    %v595 = vshrl.u32 %v594, 7
    %v596 = vsub.s32 2, %v595
    %v597 = vrot.slane %v67, %v596
    %v598 = vmul.f32 %v597, %v593
    %v599 = vadd.f32 %v592, %v598
    %v600 = vlaneseq
    %v601 = vshrl.u32 %v600, 7
    %v602 = vsub.s32 3, %v601
    %v603 = vrot.slane %v67, %v602
    %v604 = vmul.f32 %v603, %v578
    %v605 = vadd.f32 %v599, %v604
    %v606 = vld [vmem:[%s1] sm:$0xff]
    %v607 = vadd.f32 %v606, %v605
    %vm608 = vcmask 261120
    %609 = vst.msk [vmem:[#allocation4] sm:$0xff] %vm608, %v607
    %s610 = scalar_lea.vmem %s0, 2
    %v611 = vld [vmem:[%s610] sm:$0x3]
    %612 = vst [vmem:[#allocation2 + $0x1] sm:$0x3] %v611
    %v613 = vld [vmem:[#allocation2] sm:$0x3]
    %v614 = vld [vmem:[#allocation2 + $0x1] sm:$0x3]
    %615 = vmatprep.subr.mxu0 0.0
    %616 = vmatpush1.msra.mxu0 %v64
    %617 = vmatprep.subr.mxu0 0.0
    %618 = vmatpush1.msra.mxu0 %v63
    %619 = vmatprep.subr.mxu0 0.0
    %620 = vmatpush1.msra.mxu0 %v62
    %621 = vmatprep.subr.mxu0 0.0
    %622 = vmatpush1.msra.mxu0 %v61
    %623 = vmatprep.subr.mxu0 0.0
    %624 = vmatpush1.msra.mxu0 %v60
    %625 = vmatprep.subr.mxu0 0.0
    %626 = vmatpush1.msra.mxu0 %v59
    %627 = vmatprep.subr.mxu0 0.0
    %628 = vmatpush1.msra.mxu0 %v58
    %629 = vmatprep.subr.mxu0 0.0
    %630 = vmatpush1.msra.mxu0 %v57
    %631 = vmatprep.subr.mxu0 0.0
    %632 = vmatpush1.msra.mxu0 %v56
    %633 = vmatprep.subr.mxu0 0.0
    %634 = vmatpush1.msra.mxu0 %v55
    %635 = vmatprep.subr.mxu0 0.0
    %636 = vmatpush1.msra.mxu0 %v54
    %637 = vmatprep.subr.mxu0 0.0
    %638 = vmatpush1.msra.mxu0 %v53
    %639 = vmatprep.subr.mxu0 0.0
    %640 = vmatpush1.msra.mxu0 %v52
    %641 = vmatprep.subr.mxu0 0.0
    %642 = vmatpush1.msra.mxu0 %v51
    %643 = vmatprep.subr.mxu0 0.0
    %644 = vmatpush1.msra.mxu0 %v50
    %645 = vmatprep.subr.mxu0 0.0
    %646 = vmatpush1.msra.mxu0 %v49
    %647 = vmatprep.subr.mxu0 0.0
    %648 = vmatpush2.msra.mxu0 0.0
    %649 = vmatprep.subr.mxu0 0.0
    %650 = vmatpush2.msra.mxu0 0.0
    %651 = vmatprep.subr.mxu0 0.0
    %652 = vmatpush2.msra.mxu0 0.0
    %653 = vmatprep.subr.mxu0 0.0
    %654 = vmatpush2.msra.mxu0 0.0
    %655 = vmatprep.subr.mxu0 0.0
    %656 = vmatpush2.msra.mxu0 0.0
    %657 = vmatprep.subr.mxu0 0.0
    %658 = vmatpush2.msra.mxu0 0.0
    %659 = vmatprep.subr.mxu0 0.0
    %660 = vmatpush2.msra.mxu0 0.0
    %661 = vmatprep.subr.mxu0 0.0
    %662 = vmatpush2.msra.mxu0 0.0
    %663 = vmatprep.subr.mxu0 0.0
    %664 = vmatpush2.msra.mxu0 0.0
    %665 = vmatprep.subr.mxu0 0.0
    %666 = vmatpush2.msra.mxu0 0.0
    %667 = vmatprep.subr.mxu0 0.0
    %668 = vmatpush2.msra.mxu0 0.0
    %669 = vmatprep.subr.mxu0 0.0
    %670 = vmatpush2.msra.mxu0 0.0
    %671 = vmatprep.subr.mxu0 0.0
    %672 = vmatpush2.msra.mxu0 0.0
    %673 = vmatprep.subr.mxu0 0.0
    %674 = vmatpush2.msra.mxu0 0.0
    %675 = vmatprep.subr.mxu0 0.0
    %676 = vmatpush2.msra.mxu0 0.0
    %677 = vmatprep.subr.mxu0 0.0
    %678 = vmatpush2.msra.mxu0 0.0
    %679 = vmatprep.mubr.f32.mxu0 0.0
    %680 = vmatmul.mubr.f32.gmra.mxu0 %v614
    %v681 = vpop.f32.mrf.mxu0
    %v682 = vadd.f32 0.0, %v681
    %v683 = vpop.f32.mrf.mxu0
    %684 = vdwg.mxu0
    %685 = vmatprep.subr.mxu0 0.0
    %686 = vmatpush1.msra.mxu0 %v48
    %687 = vmatprep.subr.mxu0 0.0
    %688 = vmatpush1.msra.mxu0 %v47
    %689 = vmatprep.subr.mxu0 0.0
    %690 = vmatpush1.msra.mxu0 %v46
    %691 = vmatprep.subr.mxu0 0.0
    %692 = vmatpush1.msra.mxu0 %v45
    %693 = vmatprep.subr.mxu0 0.0
    %694 = vmatpush1.msra.mxu0 %v44
    %695 = vmatprep.subr.mxu0 0.0
    %696 = vmatpush1.msra.mxu0 %v43
    %697 = vmatprep.subr.mxu0 0.0
    %698 = vmatpush1.msra.mxu0 %v42
    %699 = vmatprep.subr.mxu0 0.0
    %700 = vmatpush1.msra.mxu0 %v41
    %701 = vmatprep.subr.mxu0 0.0
    %702 = vmatpush1.msra.mxu0 %v40
    %703 = vmatprep.subr.mxu0 0.0
    %704 = vmatpush1.msra.mxu0 %v39
    %705 = vmatprep.subr.mxu0 0.0
    %706 = vmatpush1.msra.mxu0 %v38
    %707 = vmatprep.subr.mxu0 0.0
    %708 = vmatpush1.msra.mxu0 %v37
    %709 = vmatprep.subr.mxu0 0.0
    %710 = vmatpush1.msra.mxu0 %v36
    %711 = vmatprep.subr.mxu0 0.0
    %712 = vmatpush1.msra.mxu0 %v35
    %713 = vmatprep.subr.mxu0 0.0
    %714 = vmatpush1.msra.mxu0 %v34
    %715 = vmatprep.subr.mxu0 0.0
    %716 = vmatpush1.msra.mxu0 %v33
    %717 = vmatprep.subr.mxu0 0.0
    %718 = vmatpush2.msra.mxu0 0.0
    %719 = vmatprep.subr.mxu0 0.0
    %720 = vmatpush2.msra.mxu0 0.0
    %721 = vmatprep.subr.mxu0 0.0
    %722 = vmatpush2.msra.mxu0 0.0
    %723 = vmatprep.subr.mxu0 0.0
    %724 = vmatpush2.msra.mxu0 0.0
    %725 = vmatprep.subr.mxu0 0.0
    %726 = vmatpush2.msra.mxu0 0.0
    %727 = vmatprep.subr.mxu0 0.0
    %728 = vmatpush2.msra.mxu0 0.0
    %729 = vmatprep.subr.mxu0 0.0
    %730 = vmatpush2.msra.mxu0 0.0
    %731 = vmatprep.subr.mxu0 0.0
    %732 = vmatpush2.msra.mxu0 0.0
    %733 = vmatprep.subr.mxu0 0.0
    %734 = vmatpush2.msra.mxu0 0.0
    %735 = vmatprep.subr.mxu0 0.0
    %736 = vmatpush2.msra.mxu0 0.0
    %737 = vmatprep.subr.mxu0 0.0
    %738 = vmatpush2.msra.mxu0 0.0
    %739 = vmatprep.subr.mxu0 0.0
    %740 = vmatpush2.msra.mxu0 0.0
    %741 = vmatprep.subr.mxu0 0.0
    %742 = vmatpush2.msra.mxu0 0.0
    %743 = vmatprep.subr.mxu0 0.0
    %744 = vmatpush2.msra.mxu0 0.0
    %745 = vmatprep.subr.mxu0 0.0
    %746 = vmatpush2.msra.mxu0 0.0
    %747 = vmatprep.subr.mxu0 0.0
    %748 = vmatpush2.msra.mxu0 0.0
    %749 = vmatprep.mubr.f32.mxu0 0.0
    %750 = vmatmul.mubr.f32.gmra.mxu0 %v613
    %v751 = vpop.f32.mrf.mxu0
    %v752 = vadd.f32 %v682, %v751
    %v753 = vpop.f32.mrf.mxu0
    %754 = vdwg.mxu0
    %v755 = vadd.f32 %v752, %v216
    %v756 = vmax.f32 %v755, 0.0
    %v757 = vld [vmem:[%s5] sm:$0xff]
    %v758 = vld [vmem:[%s5 + $0x8] sm:$0xff]
    %v759 = vld [vmem:[%s5 + $0x10] sm:$0xff]
    %v760 = vld [vmem:[%s5 + $0x18] sm:$0xff]
    %v761 = vld [vmem:[%s5 + $0x20] sm:$0xff]
    %v762 = vld [vmem:[%s5 + $0x28] sm:$0xff]
    %v763 = vld [vmem:[%s5 + $0x30] sm:$0xff]
    %v764 = vld [vmem:[%s5 + $0x38] sm:$0xff]
    %v765 = vld [vmem:[%s5 + $0x40] sm:$0xff]
    %v766 = vld [vmem:[%s5 + $0x48] sm:$0xff]
    %v767 = vld [vmem:[%s5 + $0x50] sm:$0xff]
    %v768 = vld [vmem:[%s5 + $0x58] sm:$0xff]
    %v769 = vld [vmem:[%s5 + $0x60] sm:$0xff]
    %v770 = vld [vmem:[%s5 + $0x68] sm:$0xff]
    %v771 = vld [vmem:[%s5 + $0x70] sm:$0xff]
    %v772 = vld [vmem:[%s5 + $0x78] sm:$0xff]
    %773 = vmatprep.subr.mxu0 0.0
    %774 = vmatpush1.msra.mxu0 %v772
    %775 = vmatprep.subr.mxu0 0.0
    %776 = vmatpush1.msra.mxu0 %v771
    %777 = vmatprep.subr.mxu0 0.0
    %778 = vmatpush1.msra.mxu0 %v770
    %779 = vmatprep.subr.mxu0 0.0
    %780 = vmatpush1.msra.mxu0 %v769
    %781 = vmatprep.subr.mxu0 0.0
    %782 = vmatpush1.msra.mxu0 %v768
    %783 = vmatprep.subr.mxu0 0.0
    %784 = vmatpush1.msra.mxu0 %v767
    %785 = vmatprep.subr.mxu0 0.0
    %786 = vmatpush1.msra.mxu0 %v766
    %787 = vmatprep.subr.mxu0 0.0
    %788 = vmatpush1.msra.mxu0 %v765
    %789 = vmatprep.subr.mxu0 0.0
    %790 = vmatpush1.msra.mxu0 %v764
    %791 = vmatprep.subr.mxu0 0.0
    %792 = vmatpush1.msra.mxu0 %v763
    %793 = vmatprep.subr.mxu0 0.0
    %794 = vmatpush1.msra.mxu0 %v762
    %795 = vmatprep.subr.mxu0 0.0
    %796 = vmatpush1.msra.mxu0 %v761
    %797 = vmatprep.subr.mxu0 0.0
    %798 = vmatpush1.msra.mxu0 %v760
    %799 = vmatprep.subr.mxu0 0.0
    %800 = vmatpush1.msra.mxu0 %v759
    %801 = vmatprep.subr.mxu0 0.0
    %802 = vmatpush1.msra.mxu0 %v758
    %803 = vmatprep.subr.mxu0 0.0
    %804 = vmatpush1.msra.mxu0 %v757
    %805 = vmatprep.subr.mxu0 0.0
    %806 = vmatpush2.msra.mxu0 0.0
    %807 = vmatprep.subr.mxu0 0.0
    %808 = vmatpush2.msra.mxu0 0.0
    %809 = vmatprep.subr.mxu0 0.0
    %810 = vmatpush2.msra.mxu0 0.0
    %811 = vmatprep.subr.mxu0 0.0
    %812 = vmatpush2.msra.mxu0 0.0
    %813 = vmatprep.subr.mxu0 0.0
    %814 = vmatpush2.msra.mxu0 0.0
    %815 = vmatprep.subr.mxu0 0.0
    %816 = vmatpush2.msra.mxu0 0.0
    %817 = vmatprep.subr.mxu0 0.0
    %818 = vmatpush2.msra.mxu0 0.0
    %819 = vmatprep.subr.mxu0 0.0
    %820 = vmatpush2.msra.mxu0 0.0
    %821 = vmatprep.subr.mxu0 0.0
    %822 = vmatpush2.msra.mxu0 0.0
    %823 = vmatprep.subr.mxu0 0.0
    %824 = vmatpush2.msra.mxu0 0.0
    %825 = vmatprep.subr.mxu0 0.0
    %826 = vmatpush2.msra.mxu0 0.0
    %827 = vmatprep.subr.mxu0 0.0
    %828 = vmatpush2.msra.mxu0 0.0
    %829 = vmatprep.subr.mxu0 0.0
    %830 = vmatpush2.msra.mxu0 0.0
    %831 = vmatprep.subr.mxu0 0.0
    %832 = vmatpush2.msra.mxu0 0.0
    %833 = vmatprep.subr.mxu0 0.0
    %834 = vmatpush2.msra.mxu0 0.0
    %835 = vmatprep.subr.mxu0 0.0
    %836 = vmatpush2.msra.mxu0 0.0
    %837 = vmatprep.mubr.f32.mxu0 0.0
    %838 = vmatmul.mubr.f32.gmra.mxu0 %v756
    %v839 = vpop.f32.mrf.mxu0
    %v840 = vadd.f32 %v240, %v839
    %v841 = vpop.f32.mrf.mxu0
    %842 = vdwg.mxu0
    %843 = vst.msk [vmem:[#allocation3 + $0x3] sm:$0x3] %vm312, %v840
    %v844 = vld [vmem:[%s314] sm:$0xff]
    %v845 = vld [vmem:[%s314 + $0x8] sm:$0xff]
    %v846 = vld [vmem:[%s314 + $0x10] sm:$0xff]
    %v847 = vld [vmem:[%s314 + $0x18] sm:$0xff]
    %v848 = vld [vmem:[%s314 + $0x20] sm:$0xff]
    %v849 = vld [vmem:[%s314 + $0x28] sm:$0xff]
    %v850 = vld [vmem:[%s314 + $0x30] sm:$0xff]
    %v851 = vld [vmem:[%s314 + $0x38] sm:$0xff]
    %v852 = vld [vmem:[%s314 + $0x40] sm:$0xff]
    %v853 = vld [vmem:[%s314 + $0x48] sm:$0xff]
    %v854 = vld [vmem:[%s314 + $0x50] sm:$0xff]
    %v855 = vld [vmem:[%s314 + $0x58] sm:$0xff]
    %v856 = vld [vmem:[%s314 + $0x60] sm:$0xff]
    %v857 = vld [vmem:[%s314 + $0x68] sm:$0xff]
    %v858 = vld [vmem:[%s314 + $0x70] sm:$0xff]
    %v859 = vld [vmem:[%s314 + $0x78] sm:$0xff]
    %860 = vmatprep.subr.mxu0 0.0
    %861 = vmatpush1.msra.mxu0 %v859
    %862 = vmatprep.subr.mxu0 0.0
    %863 = vmatpush1.msra.mxu0 %v858
    %864 = vmatprep.subr.mxu0 0.0
    %865 = vmatpush1.msra.mxu0 %v857
    %866 = vmatprep.subr.mxu0 0.0
    %867 = vmatpush1.msra.mxu0 %v856
    %868 = vmatprep.subr.mxu0 0.0
    %869 = vmatpush1.msra.mxu0 %v855
    %870 = vmatprep.subr.mxu0 0.0
    %871 = vmatpush1.msra.mxu0 %v854
    %872 = vmatprep.subr.mxu0 0.0
    %873 = vmatpush1.msra.mxu0 %v853
    %874 = vmatprep.subr.mxu0 0.0
    %875 = vmatpush1.msra.mxu0 %v852
    %876 = vmatprep.subr.mxu0 0.0
    %877 = vmatpush1.msra.mxu0 %v851
    %878 = vmatprep.subr.mxu0 0.0
    %879 = vmatpush1.msra.mxu0 %v850
    %880 = vmatprep.subr.mxu0 0.0
    %881 = vmatpush1.msra.mxu0 %v849
    %882 = vmatprep.subr.mxu0 0.0
    %883 = vmatpush1.msra.mxu0 %v848
    %884 = vmatprep.subr.mxu0 0.0
    %885 = vmatpush1.msra.mxu0 %v847
    %886 = vmatprep.subr.mxu0 0.0
    %887 = vmatpush1.msra.mxu0 %v846
    %888 = vmatprep.subr.mxu0 0.0
    %889 = vmatpush1.msra.mxu0 %v845
    %890 = vmatprep.subr.mxu0 0.0
    %891 = vmatpush1.msra.mxu0 %v844
    %892 = vmatprep.subr.mxu0 0.0
    %893 = vmatpush2.msra.mxu0 0.0
    %894 = vmatprep.subr.mxu0 0.0
    %895 = vmatpush2.msra.mxu0 0.0
    %896 = vmatprep.subr.mxu0 0.0
    %897 = vmatpush2.msra.mxu0 0.0
    %898 = vmatprep.subr.mxu0 0.0
    %899 = vmatpush2.msra.mxu0 0.0
    %900 = vmatprep.subr.mxu0 0.0
    %901 = vmatpush2.msra.mxu0 0.0
    %902 = vmatprep.subr.mxu0 0.0
    %903 = vmatpush2.msra.mxu0 0.0
    %904 = vmatprep.subr.mxu0 0.0
    %905 = vmatpush2.msra.mxu0 0.0
    %906 = vmatprep.subr.mxu0 0.0
    %907 = vmatpush2.msra.mxu0 0.0
    %908 = vmatprep.subr.mxu0 0.0
    %909 = vmatpush2.msra.mxu0 0.0
    %910 = vmatprep.subr.mxu0 0.0
    %911 = vmatpush2.msra.mxu0 0.0
    %912 = vmatprep.subr.mxu0 0.0
    %913 = vmatpush2.msra.mxu0 0.0
    %914 = vmatprep.subr.mxu0 0.0
    %915 = vmatpush2.msra.mxu0 0.0
    %916 = vmatprep.subr.mxu0 0.0
    %917 = vmatpush2.msra.mxu0 0.0
    %918 = vmatprep.subr.mxu0 0.0
    %919 = vmatpush2.msra.mxu0 0.0
    %920 = vmatprep.subr.mxu0 0.0
    %921 = vmatpush2.msra.mxu0 0.0
    %922 = vmatprep.subr.mxu0 0.0
    %923 = vmatpush2.msra.mxu0 0.0
    %924 = vmatprep.mubr.f32.mxu0 0.0
    %925 = vmatmul.mubr.f32.gmra.mxu0 %v756
    %v926 = vpop.f32.mrf.mxu0
    %v927 = vadd.f32 %v240, %v926
    %v928 = vpop.f32.mrf.mxu0
    %929 = vdwg.mxu0
    %930 = vst.msk [vmem:[#allocation3 + $0x5] sm:$0x3] %vm312, %v927
    %v931 = vld [vmem:[%s402] sm:$0xff]
    %v932 = vld [vmem:[%s402 + $0x8] sm:$0xff]
    %v933 = vld [vmem:[%s402 + $0x10] sm:$0xff]
    %v934 = vld [vmem:[%s402 + $0x18] sm:$0xff]
    %v935 = vld [vmem:[%s402 + $0x20] sm:$0xff]
    %v936 = vld [vmem:[%s402 + $0x28] sm:$0xff]
    %v937 = vld [vmem:[%s402 + $0x30] sm:$0xff]
    %v938 = vld [vmem:[%s402 + $0x38] sm:$0xff]
    %v939 = vld [vmem:[%s402 + $0x40] sm:$0xff]
    %v940 = vld [vmem:[%s402 + $0x48] sm:$0xff]
    %v941 = vld [vmem:[%s402 + $0x50] sm:$0xff]
    %v942 = vld [vmem:[%s402 + $0x58] sm:$0xff]
    %v943 = vld [vmem:[%s402 + $0x60] sm:$0xff]
    %v944 = vld [vmem:[%s402 + $0x68] sm:$0xff]
    %v945 = vld [vmem:[%s402 + $0x70] sm:$0xff]
    %v946 = vld [vmem:[%s402 + $0x78] sm:$0xff]
    %947 = vmatprep.subr.mxu0 0.0
    %948 = vmatpush1.msra.mxu0 %v946
    %949 = vmatprep.subr.mxu0 0.0
    %950 = vmatpush1.msra.mxu0 %v945
    %951 = vmatprep.subr.mxu0 0.0
    %952 = vmatpush1.msra.mxu0 %v944
    %953 = vmatprep.subr.mxu0 0.0
    %954 = vmatpush1.msra.mxu0 %v943
    %955 = vmatprep.subr.mxu0 0.0
    %956 = vmatpush1.msra.mxu0 %v942
    %957 = vmatprep.subr.mxu0 0.0
    %958 = vmatpush1.msra.mxu0 %v941
    %959 = vmatprep.subr.mxu0 0.0
    %960 = vmatpush1.msra.mxu0 %v940
    %961 = vmatprep.subr.mxu0 0.0
    %962 = vmatpush1.msra.mxu0 %v939
    %963 = vmatprep.subr.mxu0 0.0
    %964 = vmatpush1.msra.mxu0 %v938
    %965 = vmatprep.subr.mxu0 0.0
    %966 = vmatpush1.msra.mxu0 %v937
    %967 = vmatprep.subr.mxu0 0.0
    %968 = vmatpush1.msra.mxu0 %v936
    %969 = vmatprep.subr.mxu0 0.0
    %970 = vmatpush1.msra.mxu0 %v935
    %971 = vmatprep.subr.mxu0 0.0
    %972 = vmatpush1.msra.mxu0 %v934
    %973 = vmatprep.subr.mxu0 0.0
    %974 = vmatpush1.msra.mxu0 %v933
    %975 = vmatprep.subr.mxu0 0.0
    %976 = vmatpush1.msra.mxu0 %v932
    %977 = vmatprep.subr.mxu0 0.0
    %978 = vmatpush1.msra.mxu0 %v931
    %979 = vmatprep.subr.mxu0 0.0
    %980 = vmatpush2.msra.mxu0 0.0
    %981 = vmatprep.subr.mxu0 0.0
    %982 = vmatpush2.msra.mxu0 0.0
    %983 = vmatprep.subr.mxu0 0.0
    %984 = vmatpush2.msra.mxu0 0.0
    %985 = vmatprep.subr.mxu0 0.0
    %986 = vmatpush2.msra.mxu0 0.0
    %987 = vmatprep.subr.mxu0 0.0
    %988 = vmatpush2.msra.mxu0 0.0
    %989 = vmatprep.subr.mxu0 0.0
    %990 = vmatpush2.msra.mxu0 0.0
    %991 = vmatprep.subr.mxu0 0.0
    %992 = vmatpush2.msra.mxu0 0.0
    %993 = vmatprep.subr.mxu0 0.0
    %994 = vmatpush2.msra.mxu0 0.0
    %995 = vmatprep.subr.mxu0 0.0
    %996 = vmatpush2.msra.mxu0 0.0
    %997 = vmatprep.subr.mxu0 0.0
    %998 = vmatpush2.msra.mxu0 0.0
    %999 = vmatprep.subr.mxu0 0.0
    %1000 = vmatpush2.msra.mxu0 0.0
    %1001 = vmatprep.subr.mxu0 0.0
    %1002 = vmatpush2.msra.mxu0 0.0
    %1003 = vmatprep.subr.mxu0 0.0
    %1004 = vmatpush2.msra.mxu0 0.0
    %1005 = vmatprep.subr.mxu0 0.0
    %1006 = vmatpush2.msra.mxu0 0.0
    %1007 = vmatprep.subr.mxu0 0.0
    %1008 = vmatpush2.msra.mxu0 0.0
    %1009 = vmatprep.subr.mxu0 0.0
    %1010 = vmatpush2.msra.mxu0 0.0
    %1011 = vmatprep.mubr.f32.mxu0 0.0
    %1012 = vmatmul.mubr.f32.gmra.mxu0 %v756
    %v1013 = vpop.f32.mrf.mxu0
    %v1014 = vadd.f32 %v240, %v1013
    %v1015 = vpop.f32.mrf.mxu0
    %1016 = vdwg.mxu0
    %1017 = vst.msk [vmem:[#allocation3 + $0x7] sm:$0x3] %vm312, %v1014
    %v1018 = vld [vmem:[%s490] sm:$0xff]
    %v1019 = vld [vmem:[%s490 + $0x8] sm:$0xff]
    %v1020 = vld [vmem:[%s490 + $0x10] sm:$0xff]
    %v1021 = vld [vmem:[%s490 + $0x18] sm:$0xff]
    %v1022 = vld [vmem:[%s490 + $0x20] sm:$0xff]
    %v1023 = vld [vmem:[%s490 + $0x28] sm:$0xff]
    %v1024 = vld [vmem:[%s490 + $0x30] sm:$0xff]
    %v1025 = vld [vmem:[%s490 + $0x38] sm:$0xff]
    %v1026 = vld [vmem:[%s490 + $0x40] sm:$0xff]
    %v1027 = vld [vmem:[%s490 + $0x48] sm:$0xff]
    %v1028 = vld [vmem:[%s490 + $0x50] sm:$0xff]
    %v1029 = vld [vmem:[%s490 + $0x58] sm:$0xff]
    %v1030 = vld [vmem:[%s490 + $0x60] sm:$0xff]
    %v1031 = vld [vmem:[%s490 + $0x68] sm:$0xff]
    %v1032 = vld [vmem:[%s490 + $0x70] sm:$0xff]
    %v1033 = vld [vmem:[%s490 + $0x78] sm:$0xff]
    %1034 = vmatprep.subr.mxu0 0.0
    %1035 = vmatpush1.msra.mxu0 %v1033
    %1036 = vmatprep.subr.mxu0 0.0
    %1037 = vmatpush1.msra.mxu0 %v1032
    %1038 = vmatprep.subr.mxu0 0.0
    %1039 = vmatpush1.msra.mxu0 %v1031
    %1040 = vmatprep.subr.mxu0 0.0
    %1041 = vmatpush1.msra.mxu0 %v1030
    %1042 = vmatprep.subr.mxu0 0.0
    %1043 = vmatpush1.msra.mxu0 %v1029
    %1044 = vmatprep.subr.mxu0 0.0
    %1045 = vmatpush1.msra.mxu0 %v1028
    %1046 = vmatprep.subr.mxu0 0.0
    %1047 = vmatpush1.msra.mxu0 %v1027
    %1048 = vmatprep.subr.mxu0 0.0
    %1049 = vmatpush1.msra.mxu0 %v1026
    %1050 = vmatprep.subr.mxu0 0.0
    %1051 = vmatpush1.msra.mxu0 %v1025
    %1052 = vmatprep.subr.mxu0 0.0
    %1053 = vmatpush1.msra.mxu0 %v1024
    %1054 = vmatprep.subr.mxu0 0.0
    %1055 = vmatpush1.msra.mxu0 %v1023
    %1056 = vmatprep.subr.mxu0 0.0
    %1057 = vmatpush1.msra.mxu0 %v1022
    %1058 = vmatprep.subr.mxu0 0.0
    %1059 = vmatpush1.msra.mxu0 %v1021
    %1060 = vmatprep.subr.mxu0 0.0
    %1061 = vmatpush1.msra.mxu0 %v1020
    %1062 = vmatprep.subr.mxu0 0.0
    %1063 = vmatpush1.msra.mxu0 %v1019
    %1064 = vmatprep.subr.mxu0 0.0
    %1065 = vmatpush1.msra.mxu0 %v1018
    %1066 = vmatprep.subr.mxu0 0.0
    %1067 = vmatpush2.msra.mxu0 0.0
    %1068 = vmatprep.subr.mxu0 0.0
    %1069 = vmatpush2.msra.mxu0 0.0
    %1070 = vmatprep.subr.mxu0 0.0
    %1071 = vmatpush2.msra.mxu0 0.0
    %1072 = vmatprep.subr.mxu0 0.0
    %1073 = vmatpush2.msra.mxu0 0.0
    %1074 = vmatprep.subr.mxu0 0.0
    %1075 = vmatpush2.msra.mxu0 0.0
    %1076 = vmatprep.subr.mxu0 0.0
    %1077 = vmatpush2.msra.mxu0 0.0
    %1078 = vmatprep.subr.mxu0 0.0
    %1079 = vmatpush2.msra.mxu0 0.0
    %1080 = vmatprep.subr.mxu0 0.0
    %1081 = vmatpush2.msra.mxu0 0.0
    %1082 = vmatprep.subr.mxu0 0.0
    %1083 = vmatpush2.msra.mxu0 0.0
    %1084 = vmatprep.subr.mxu0 0.0
    %1085 = vmatpush2.msra.mxu0 0.0
    %1086 = vmatprep.subr.mxu0 0.0
    %1087 = vmatpush2.msra.mxu0 0.0
    %1088 = vmatprep.subr.mxu0 0.0
    %1089 = vmatpush2.msra.mxu0 0.0
    %1090 = vmatprep.subr.mxu0 0.0
    %1091 = vmatpush2.msra.mxu0 0.0
    %1092 = vmatprep.subr.mxu0 0.0
    %1093 = vmatpush2.msra.mxu0 0.0
    %1094 = vmatprep.subr.mxu0 0.0
    %1095 = vmatpush2.msra.mxu0 0.0
    %1096 = vmatprep.subr.mxu0 0.0
    %1097 = vmatpush2.msra.mxu0 0.0
    %1098 = vmatprep.mubr.f32.mxu0 0.0
    %1099 = vmatmul.mubr.f32.gmra.mxu0 %v756
    %v1100 = vpop.f32.mrf.mxu0
    %v1101 = vadd.f32 %v240, %v1100
    %v1102 = vpop.f32.mrf.mxu0
    %1103 = vdwg.mxu0
    %1104 = vst.msk [vmem:[#allocation3 + $0x9] sm:$0x3] %vm312, %v1101
    %v1105 = vld [vmem:[#allocation3 + $0x3] sm:$0xff]
    %v1106 = vld [vmem:[#allocation3] sm:$0xff]
    %v1107 = vmul.f32 %v583, %v1106
    %v1108 = vadd.f32 %v1105, %v1107
    %v1109 = vld [vmem:[#allocation3 + $0x1] sm:$0xff]
    %v1110 = vmul.f32 %v590, %v1109
    %v1111 = vadd.f32 %v1108, %v1110
    %v1112 = vld [vmem:[#allocation3 + $0x2] sm:$0xff]
    %v1113 = vmul.f32 %v597, %v1112
    %v1114 = vadd.f32 %v1111, %v1113
    %v1115 = vmul.f32 %v603, %v1105
    %v1116 = vadd.f32 %v1114, %v1115
    %s1117 = scalar_lea.vmem %s1, 8
    %v1118 = vld [vmem:[%s1117] sm:$0xff]
    %v1119 = vadd.f32 %v1118, %v1116
    %s1120 = scalar_lea.vmem [#allocation4], 8
    %1121 = vst.msk [vmem:[%s1120] sm:$0xff] %vm608, %v1119
    // Predicated region
    $region34: #{tpu_custom_call.1} parent=1 // pred_check
      _
    $region35: #{tpu_custom_call.1} parent=1 // pred_check_branch
      %1123 = sbr.rel (0) target = $region37
    $region36: #{tpu_custom_call.1} parent=1 // pred_region
      %s1125 = ssub.s32 256, 256
      %1126 = vsyncadd [#allocation5], %s1125
      %s1127 = sshll.u32 [#allocation4], 4
      %s1128 = int_to_ptr.vmem [resolvable:$true] %s1127
      %1133 = dma.vmem_to_hbm [thread:$0]  %s1128, 256, %s8, [#allocation5], 128, 128, 8
    $region37: #{tpu_custom_call.1} parent=1 // pred_fallthru
      _
    // Predicated region
    $region38: #{tpu_custom_call.1} parent=1 // pred_check
      _
    $region39: #{tpu_custom_call.1} parent=1 // pred_check_branch
      %1135 = sbr.rel (0) target = $region41
    $region40: #{tpu_custom_call.1} parent=1 // pred_region
      %1136 = dma.done [#allocation5], 256
    $region41: #{tpu_custom_call.1} parent=1 // pred_fallthru
      _
    %1137 = vsyncpa [#allocation5], 1

</llo_original>
